<compile_context>
chip_gen: v5e
topology: v5e:2x2
jax: 0.10.0
libtpu: 0.0.40
codegen_flags: <defaults>
</compile_context>

<pallas_src>
import numpy as np
import jax
import jax.numpy as jnp
from jax import lax
from jax.experimental import pallas as pl
from jax.experimental.pallas import tpu as pltpu


_HIGHEST = jax.lax.Precision.HIGHEST


def _get_positive_k(k, n):
    """WildcatPool2d helper: resolve a (possibly fractional) k against n positions."""
    if k <= 0:
        return 0
    if k < 1:
        return int(round(k * n))
    if k > n:
        return int(n)
    return int(k)


# ----------------------------------------------------------------------------
# Fused kernel: stem conv -> classifier(+class-wise pool) conv -> mask -> wildcat pool
# ----------------------------------------------------------------------------

def _make_fused_kernel(B, C, S, kmax, kmin, alpha, has_mask):
    use_min = (kmin > 0) and (alpha != 0.0)   # mirrors torch's `if kmin > 0 and alpha is not 0`
    R = B * C

    def kernel(slab_ref, wb1_ref, wb2_ref, o_ref):
        # ---- stage 1: stand-in backbone (2x2/stride-2 patch-embed conv + ReLU) ----
        taps = slab_ref[0, 0:12, :]                                     # (12, B*S) im2col taps
        w1 = wb1_ref[:, 0:12]                                           # (F, 12)
        b1 = wb1_ref[:, 12:13]                                          # (F, 1)
        feats = jnp.dot(w1, taps, precision=_HIGHEST,
                        preferred_element_type=jnp.float32)
        feats = jnp.maximum(feats + b1, 0.0)                            # (F, B*S)

        # ---- stage 2: WildCat 1x1 classifier conv with ClassWisePool pre-fused ----
        Fdim = wb2_ref.shape[1] - 1
        w2 = wb2_ref[:, 0:Fdim]                                         # (C, F)
        b2 = wb2_ref[:, Fdim:Fdim + 1]                                  # (C, 1)
        cp = jnp.dot(w2, feats, precision=_HIGHEST,
                     preferred_element_type=jnp.float32) + b2           # (C, B*S)

        # ---- stage 3: bounding-box mask (where mask == 0 -> -inf), mask path only ----
        if has_mask:
            mask = slab_ref[0, 12:13, :]                                # (1, B*S)
            cp = jnp.where(mask == 0.0, -jnp.inf, cp)

        # ---- stage 4: restack (C, B*S) -> (B*C, S): lane-aligned slices, sublane concat ----
        if B == 1:
            xstk = cp
        else:
            xstk = jnp.concatenate([cp[:, b * S:(b + 1) * S] for b in range(B)],
                                   axis=0)                              # rows = b*C + c

        # ---- stage 5: WildcatPool2d (iterative tie-safe top-k over lanes) ----
        if use_min:
            # bottom-k of x == -(top-k of -x): one extraction loop over a (2R, S) slab.
            vals = jnp.concatenate([xstk, -xstk], axis=0)               # (2R, S)
            K = max(kmax, kmin)
            kvec = jnp.concatenate([jnp.full((R, 1), kmax, jnp.int32),
                                    jnp.full((R, 1), kmin, jnp.int32)], axis=0)
        else:
            vals = xstk
            K = kmax
            kvec = None

        rows = vals.shape[0]
        lane = lax.broadcasted_iota(jnp.int32, (rows, S), 1).astype(jnp.float32)
        v = vals
        tot = jnp.zeros((rows, 1), jnp.float32)
        for step in range(K):                                           # K tiny & static
            ext = jnp.max(v, axis=-1, keepdims=True)
            if kvec is None:
                tot = tot + ext
            else:
                # accumulate only up to each row-group's own k (where, not *, to avoid inf*0)
                tot = tot + jnp.where(step < kvec, ext, 0.0)
            # remove exactly ONE occurrence per step (tie-safe, like a sort-based top-k)
            idx = jnp.min(jnp.where(v == ext, lane, jnp.float32(S)),
                          axis=-1, keepdims=True)
            v = jnp.where(lane == idx, -jnp.inf, v)

        out = tot[0:R] / float(kmax)                                    # mean of top-kmax
        if use_min:
            bot = -(tot[R:2 * R] / float(kmin))                         # mean of bottom-kmin
            out = (out + alpha * bot) * 0.5
        o_ref[0] = out                                                  # (B*C, 1)

    return kernel


# ----------------------------------------------------------------------------
# Wrapper: single packed relayout + single pallas_call
# ----------------------------------------------------------------------------

def bbox_wildcat_forward(params, x, *, kmax=3, kmin=3, alpha=0.7):
    """Pallas forward of BoundingBoxWildCatModel (scale_factor=0.5, eval mode).

    x: (N, 3, H, W) or (N, 4, H, W) NCHW; returns (N, num_classes).
    """
    x = x.astype(jnp.float32)
    N, Cin, H, W = x.shape
    assert Cin in (3, 4)

    w_stem = params["w_stem"].astype(jnp.float32)        # (F, 3, 2, 2)  stand-in trunk (OIHW)
    b_stem = params["b_stem"].astype(jnp.float32)        # (F,)
    w_cls = params["w_cls"].astype(jnp.float32)          # (C*M, F)      1x1 classifier conv
    b_cls = params["b_cls"].astype(jnp.float32)          # (C*M,)
    M = int(params["num_maps"])
    F_, CM = w_stem.shape[0], w_cls.shape[0]
    C = CM // M
    Hc, Wc = H // 2, W // 2
    S = Hc * Wc                                          # 256 at H=W=32 -> lane-dense

    # ---- fuse ClassWisePool (average over num_maps) into the classifier weights ----
    w_eff = w_cls.reshape(C, M, F_).mean(axis=1)         # (C, F)  == pcw @ w_cls
    b_eff = b_cls.reshape(C, M).mean(axis=1)             # (C,)    == pcw @ b_cls

    # ---- pack constants: [W | b] per stage -> 2 grid-invariant prime-time DMAs ----
    wb1 = jnp.concatenate([w_stem.reshape(F_, 12), b_stem[:, None]], axis=1)  # (F, 13)
    wb2 = jnp.concatenate([w_eff, b_eff[:, None]], axis=1)                    # (C, F+1)

    # ---- batch-block the grid: B elements per step, keep >= 2 steps for v7x dual-TC ----
    if N >= 2 and N % 2 == 0:
        G, B = 2, N // 2
    else:
        G, B = N, 1
    BS = B * S

    # ---- ONE packed relayout: (G, Cin*4, B*S); rows 0..11 = im2col taps (c*4+di*2+dj),
    #      row 12 (4-channel path) = mask[2i, 2j] == nearest interp at scale 0.5 ----
    has_mask = (Cin == 4)
    rows = Cin * 4
    slab = x.reshape(G, B, Cin, Hc, 2, Wc, 2)
    slab = slab.transpose(0, 2, 4, 6, 1, 3, 5).reshape(G, rows, BS)

    km = _get_positive_k(kmax, S)
    kn = _get_positive_k(kmax if kmin is None else kmin, S)
    kernel = _make_fused_kernel(B, C, S, km, kn, float(alpha), has_mask)

    out = pl.pallas_call(
        kernel,
        out_shape=jax.ShapeDtypeStruct((G, B * C, 1), jnp.float32),
        grid=(G,),
        in_specs=[
            pl.BlockSpec((1, rows, BS), lambda g: (g, 0, 0)),   # per-step packed slab
            pl.BlockSpec((F_, 13), lambda g: (0, 0)),           # grid-invariant constants:
            pl.BlockSpec((C, F_ + 1), lambda g: (0, 0)),        #   fetched once
        ],
        out_specs=pl.BlockSpec((1, B * C, 1), lambda g: (g, 0, 0)),
        compiler_params=pltpu.CompilerParams(dimension_semantics=("parallel",)),
    )(slab, wb1, wb2)

    # rows within a block are ordered b*C + c, blocks are consecutive batches -> (N, C)
    return out.reshape(N, C)


# ----------------------------------------------------------------------------
# Pure-JAX reference (independent ops, HIGHEST precision) for correctness check
# ----------------------------------------------------------------------------

def _reference(params, x, *, kmax=3, kmin=3, alpha=0.7):
    x = x.astype(jnp.float32)
    w_stem, b_stem = params["w_stem"], params["b_stem"]
    w_cls, b_cls = params["w_cls"], params["b_cls"]
    M = int(params["num_maps"])

    feats = lax.conv_general_dilated(
        x[:, :3], w_stem, (2, 2), "VALID",
        dimension_numbers=("NCHW", "OIHW", "NCHW"), precision=_HIGHEST)
    feats = jnp.maximum(feats + b_stem[None, :, None, None], 0.0)
    clas = lax.conv_general_dilated(
        feats, w_cls[:, :, None, None], (1, 1), "VALID",
        dimension_numbers=("NCHW", "OIHW", "NCHW"), precision=_HIGHEST)
    clas = clas + b_cls[None, :, None, None]

    N, CM, h, w = clas.shape
    C = CM // M
    cpool = clas.reshape(N, C, M, h, w).mean(axis=2)                     # ClassWisePool

    if x.shape[1] == 4:
        mask = x[:, 3:4, ::2, ::2]                                       # nearest, scale 0.5
        cpool = jnp.where(mask == 0.0, -jnp.inf, cpool)

    n = h * w
    flat = cpool.reshape(N, C, n)
    km = _get_positive_k(kmax, n)
    kn = _get_positive_k(kmax if kmin is None else kmin, n)
    s_asc = jnp.sort(flat, axis=-1)
    out = s_asc[..., n - km:].mean(axis=-1)
    if kn > 0 and alpha != 0:
        out = (out + alpha * s_asc[..., :kn].mean(axis=-1)) * 0.5
    return out


# ----------------------------------------------------------------------------
# Main
# ----------------------------------------------------------------------------

if __name__ == "__main__":
    key = jax.random.PRNGKey(0)
    ks = jax.random.split(key, 6)

    N, H, W = 4, 32, 32
    num_features, num_classes, num_maps = 16, 4, 4
    CM = num_classes * num_maps

    x_rgb = jax.random.normal(ks[0], (N, 3, H, W), jnp.float32)
    # Binary bounding-box mask as the 4th channel (~70% foreground keeps top-k finite).
    mask = (jax.random.uniform(ks[1], (N, 1, H, W)) > 0.3).astype(jnp.float32)
    x4 = jnp.concatenate([x_rgb, mask], axis=1)                          # (4, 4, 32, 32)

    params = dict(
        w_stem=0.3 * jax.random.normal(ks[2], (num_features, 3, 2, 2), jnp.float32),
        b_stem=0.1 * jax.random.normal(ks[3], (num_features,), jnp.float32),
        w_cls=0.3 * jax.random.normal(ks[4], (CM, num_features), jnp.float32),
        b_cls=0.1 * jax.random.normal(ks[5], (CM,), jnp.float32),
        num_maps=num_maps,
    )

    # Path 1: 4-channel input (mask branch), alpha=0 skips the bottom-k term (torch skip).
    fwd4 = jax.jit(lambda xx: bbox_wildcat_forward(params, xx, kmax=3, kmin=3, alpha=0.0))
    out4 = jax.block_until_ready(fwd4(x4))
    ref4 = jax.block_until_ready(_reference(params, x4, kmax=3, kmin=3, alpha=0.0))
    assert out4.shape == (N, num_classes)
    np.testing.assert_allclose(np.asarray(out4), np.asarray(ref4), atol=1e-4, rtol=1e-4)

    # Path 2: 3-channel input (no-mask kernel variant); exercises the kmin/alpha term
    # with the stacked +x/-x single-extraction-loop pooling.
    fwd3 = jax.jit(lambda xx: bbox_wildcat_forward(params, xx, kmax=3, kmin=2, alpha=0.7))
    out3 = jax.block_until_ready(fwd3(x_rgb))
    ref3 = jax.block_until_ready(_reference(params, x_rgb, kmax=3, kmin=2, alpha=0.7))
    np.testing.assert_allclose(np.asarray(out3), np.asarray(ref3), atol=1e-4, rtol=1e-4)

    # Path 3: 4-channel input with alpha != 0 — masked -inf pixels flow into the
    # bottom-kmin mean (matches torch's sort-based pooling); checks no NaNs and that
    # inf positions/signs agree with the reference.
    fwd4b = jax.jit(lambda xx: bbox_wildcat_forward(params, xx, kmax=3, kmin=3, alpha=0.7))
    out4b = jax.block_until_ready(fwd4b(x4))
    ref4b = jax.block_until_ready(_reference(params, x4, kmax=3, kmin=3, alpha=0.7))
    assert not np.any(np.isnan(np.asarray(out4b)))
    np.testing.assert_allclose(np.asarray(out4b), np.asarray(ref4b), atol=1e-4, rtol=1e-4)

    print("KERNEL_OK")
</pallas_src>

<mosaic_0001>
module attributes {stable_mosaic.version = 11 : i64} {
  func.func @kernel(%arg0: i32, %arg1: memref<1x16x512xf32, #tpu.memory_space<vmem>>, %arg2: memref<16x13xf32, #tpu.memory_space<vmem>>, %arg3: memref<4x17xf32, #tpu.memory_space<vmem>>, %arg4: memref<1x8x1xf32, #tpu.memory_space<vmem>>) attributes {dimension_semantics = [#tpu.dimension_semantics<parallel>], iteration_bounds = array<i64: 2>, scalar_prefetch = 0 : i64, scratch_operands = 0 : i64, tpu.core_type = #tpu.core_type<tc>, window_params = [{transform_indices = @transform_0, window_bounds = array<i64: 1, 16, 512>}, {pipeline_mode = #tpu.pipeline_mode<synchronous>, transform_indices = @transform_1, window_bounds = array<i64: 16, 13>}, {pipeline_mode = #tpu.pipeline_mode<synchronous>, transform_indices = @transform_2, window_bounds = array<i64: 4, 17>}, {transform_indices = @transform_3, window_bounds = array<i64: 1, 8, 1>}]} {
    %c0 = arith.constant 0 : index
    %c0_0 = arith.constant 0 : index
    %c0_1 = arith.constant 0 : index
    %0 = vector.load %arg1[%c0, %c0_0, %c0_1] : memref<1x16x512xf32, #tpu.memory_space<vmem>>, vector<1x12x512xf32>
    %1 = vector.shape_cast %0 : vector<1x12x512xf32> to vector<12x512xf32>
    %c0_2 = arith.constant 0 : index
    %c0_3 = arith.constant 0 : index
    %2 = vector.load %arg2[%c0_2, %c0_3] : memref<16x13xf32, #tpu.memory_space<vmem>>, vector<16x12xf32>
    %c0_4 = arith.constant 0 : index
    %c12 = arith.constant 12 : index
    %3 = vector.load %arg2[%c0_4, %c12] : memref<16x13xf32, #tpu.memory_space<vmem>>, vector<16x1xf32>
    %cst = arith.constant dense<0.000000e+00> : vector<16x512xf32>
    %4 = tpu.matmul %2, %1, %cst {dimension_numbers = #tpu.dot_dimension_numbers<[1], [0], [0], [1], [0, 0, 1, 1], [], []>, precision = #tpu.contract_precision<fp32>} : vector<16x12xf32>, vector<12x512xf32>, vector<16x512xf32> -> vector<16x512xf32>
    %5 = vector.broadcast %3 : vector<16x1xf32> to vector<16x512xf32>
    %6 = arith.addf %4, %5 : vector<16x512xf32>
    %cst_5 = arith.constant 0.000000e+00 : f32
    %7 = vector.broadcast %cst_5 : f32 to vector<16x512xf32>
    %8 = arith.maximumf %6, %7 : vector<16x512xf32>
    %c0_6 = arith.constant 0 : index
    %c0_7 = arith.constant 0 : index
    %9 = vector.load %arg3[%c0_6, %c0_7] : memref<4x17xf32, #tpu.memory_space<vmem>>, vector<4x16xf32>
    %c0_8 = arith.constant 0 : index
    %c16 = arith.constant 16 : index
    %10 = vector.load %arg3[%c0_8, %c16] : memref<4x17xf32, #tpu.memory_space<vmem>>, vector<4x1xf32>
    %cst_9 = arith.constant dense<0.000000e+00> : vector<4x512xf32>
    %11 = tpu.matmul %9, %8, %cst_9 {dimension_numbers = #tpu.dot_dimension_numbers<[1], [0], [0], [1], [0, 0, 1, 1], [], []>, precision = #tpu.contract_precision<fp32>} : vector<4x16xf32>, vector<16x512xf32>, vector<4x512xf32> -> vector<4x512xf32>
    %12 = vector.broadcast %10 : vector<4x1xf32> to vector<4x512xf32>
    %13 = arith.addf %11, %12 : vector<4x512xf32>
    %c0_10 = arith.constant 0 : index
    %c12_11 = arith.constant 12 : index
    %c0_12 = arith.constant 0 : index
    %14 = vector.load %arg1[%c0_10, %c12_11, %c0_12] : memref<1x16x512xf32, #tpu.memory_space<vmem>>, vector<1x1x512xf32>
    %15 = vector.shape_cast %14 : vector<1x1x512xf32> to vector<1x512xf32>
    %cst_13 = arith.constant 0.000000e+00 : f32
    %16 = vector.broadcast %cst_13 : f32 to vector<1x512xf32>
    %17 = arith.cmpf oeq, %15, %16 : vector<1x512xf32>
    %cst_14 = arith.constant 0xFF800000 : f32
    %18 = vector.shape_cast %17 : vector<1x512xi1> to vector<1x512xi1>
    %19 = vector.broadcast %18 : vector<1x512xi1> to vector<4x512xi1>
    %20 = vector.broadcast %cst_14 : f32 to vector<4x512xf32>
    %21 = arith.select %19, %20, %13 : vector<4x512xi1>, vector<4x512xf32>
    %22 = vector.extract_strided_slice %21 {offsets = [0, 0], sizes = [4, 256], strides = [1, 1]} : vector<4x512xf32> to vector<4x256xf32>
    %23 = vector.extract_strided_slice %21 {offsets = [0, 256], sizes = [4, 256], strides = [1, 1]} : vector<4x512xf32> to vector<4x256xf32>
    %24 = tpu.concatenate %22, %23 in 0 : vector<4x256xf32>, vector<4x256xf32> -> vector<8x256xf32>
    %25 = tpu.iota {dimensions = array<i32: 1>} : vector<8x256xi32>
    %26 = arith.sitofp %25 : vector<8x256xi32> to vector<8x256xf32>
    %cst_15 = arith.constant 0.000000e+00 : f32
    %27 = vector.broadcast %cst_15 : f32 to vector<8x1xf32>
    %cst_16 = arith.constant dense<0xFF800000> : vector<8xf32>
    %28 = vector.multi_reduction <maximumf>, %24, %cst_16 [1] : vector<8x256xf32> to vector<8xf32>
    %29 = vector.shape_cast %28 : vector<8xf32> to vector<8x1xf32>
    %30 = arith.addf %27, %29 : vector<8x1xf32>
    %31 = vector.broadcast %29 : vector<8x1xf32> to vector<8x256xf32>
    %32 = arith.cmpf oeq, %24, %31 : vector<8x256xf32>
    %cst_17 = arith.constant 2.560000e+02 : f32
    %33 = vector.broadcast %cst_17 : f32 to vector<8x256xf32>
    %34 = arith.select %32, %26, %33 : vector<8x256xi1>, vector<8x256xf32>
    %cst_18 = arith.constant dense<0x7F800000> : vector<8xf32>
    %35 = vector.multi_reduction <minimumf>, %34, %cst_18 [1] : vector<8x256xf32> to vector<8xf32>
    %36 = vector.shape_cast %35 : vector<8xf32> to vector<8x1xf32>
    %37 = vector.broadcast %36 : vector<8x1xf32> to vector<8x256xf32>
    %38 = arith.cmpf oeq, %26, %37 : vector<8x256xf32>
    %cst_19 = arith.constant 0xFF800000 : f32
    %39 = vector.broadcast %cst_19 : f32 to vector<8x256xf32>
    %40 = arith.select %38, %39, %24 : vector<8x256xi1>, vector<8x256xf32>
    %cst_20 = arith.constant dense<0xFF800000> : vector<8xf32>
    %41 = vector.multi_reduction <maximumf>, %40, %cst_20 [1] : vector<8x256xf32> to vector<8xf32>
    %42 = vector.shape_cast %41 : vector<8xf32> to vector<8x1xf32>
    %43 = arith.addf %30, %42 : vector<8x1xf32>
    %44 = vector.broadcast %42 : vector<8x1xf32> to vector<8x256xf32>
    %45 = arith.cmpf oeq, %40, %44 : vector<8x256xf32>
    %cst_21 = arith.constant 2.560000e+02 : f32
    %46 = vector.broadcast %cst_21 : f32 to vector<8x256xf32>
    %47 = arith.select %45, %26, %46 : vector<8x256xi1>, vector<8x256xf32>
    %cst_22 = arith.constant dense<0x7F800000> : vector<8xf32>
    %48 = vector.multi_reduction <minimumf>, %47, %cst_22 [1] : vector<8x256xf32> to vector<8xf32>
    %49 = vector.shape_cast %48 : vector<8xf32> to vector<8x1xf32>
    %50 = vector.broadcast %49 : vector<8x1xf32> to vector<8x256xf32>
    %51 = arith.cmpf oeq, %26, %50 : vector<8x256xf32>
    %cst_23 = arith.constant 0xFF800000 : f32
    %52 = vector.broadcast %cst_23 : f32 to vector<8x256xf32>
    %53 = arith.select %51, %52, %40 : vector<8x256xi1>, vector<8x256xf32>
    %cst_24 = arith.constant dense<0xFF800000> : vector<8xf32>
    %54 = vector.multi_reduction <maximumf>, %53, %cst_24 [1] : vector<8x256xf32> to vector<8xf32>
    %55 = vector.shape_cast %54 : vector<8xf32> to vector<8x1xf32>
    %56 = arith.addf %43, %55 : vector<8x1xf32>
    %cst_25 = arith.constant 3.000000e+00 : f32
    %57 = vector.broadcast %cst_25 : f32 to vector<8x1xf32>
    %58 = arith.divf %56, %57 : vector<8x1xf32>
    %c0_26 = arith.constant 0 : index
    %c0_27 = arith.constant 0 : index
    %c0_28 = arith.constant 0 : index
    %59 = vector.load %arg4[%c0_26, %c0_27, %c0_28] : memref<1x8x1xf32, #tpu.memory_space<vmem>>, vector<1x8x1xf32>
    %60 = vector.shape_cast %59 : vector<1x8x1xf32> to vector<8x1xf32>
    %61 = vector.shape_cast %58 : vector<8x1xf32> to vector<1x8x1xf32>
    tpu.vector_store %arg4[%c0_26, %c0_27, %c0_28], %61 {strides = array<i32>} : memref<1x8x1xf32, #tpu.memory_space<vmem>>, vector<1x8x1xf32>,
    return
  }
  func.func @transform_0(%arg0: i32) -> (i32, i32, i32) {
    %c0_i32 = arith.constant 0 : i32
    %c0_i32_0 = arith.constant 0 : i32
    %c0_i32_1 = arith.constant 0 : i32
    return %arg0, %c0_i32, %c0_i32_0 : i32, i32, i32
  }
  func.func @transform_1(%arg0: i32) -> (i32, i32) {
    %c0_i32 = arith.constant 0 : i32
    %c0_i32_0 = arith.constant 0 : i32
    %c0_i32_1 = arith.constant 0 : i32
    return %c0_i32, %c0_i32_0 : i32, i32
  }
  func.func @transform_2(%arg0: i32) -> (i32, i32) {
    %c0_i32 = arith.constant 0 : i32
    %c0_i32_0 = arith.constant 0 : i32
    %c0_i32_1 = arith.constant 0 : i32
    return %c0_i32, %c0_i32_0 : i32, i32
  }
  func.func @transform_3(%arg0: i32) -> (i32, i32, i32) {
    %c0_i32 = arith.constant 0 : i32
    %c0_i32_0 = arith.constant 0 : i32
    %c0_i32_1 = arith.constant 0 : i32
    return %arg0, %c0_i32, %c0_i32_0 : i32, i32, i32
  }
}

</mosaic_0001>

<llo_original>
// kernel: _lambda_.1
$region0: #{_lambda_.1}
  #allocation0 [shape = 'u32[]', space=smem, size = 0x4, offset = 0x4, fixed_abs, tag = 'smem constant byte address 0x4 - core index']
  #allocation1 [shape = 'u32[72,128]{1,0:T(1,128)}', space=vmem, size = 0x9000, scoped, tag = 'internal scratch']
  %s0 = inlined_call_operand.vmem [shape: f32[2,16,512], index: 0, kind: input, shape index: {}]
  %s1 = inlined_call_operand.vmem [shape: f32[16,13], index: 1, kind: input, shape index: {}]
  %s2 = inlined_call_operand.vmem [shape: f32[4,17], index: 2, kind: input, shape index: {}]
  %s3 = inlined_call_operand.vmem [shape: f32[2,8,1], index: 3, kind: output, shape index: {}]
  %s4 = sld [smem:[#allocation0]]
  $region45: #{_lambda_.1} parent=0
    _
  %s6 = ssub.s32 1, %s4
  %s7 = scalar_select 0, %s6, %s4
  loop: start=0, step=1, limit=4
  $region2: #{_lambda_.1} parent=0 // loop_pre_header
    _
  $region3: #{_lambda_.1} parent=0 // loop_header
    %s9 = sphi 0, %s13
    %p10 = scmp.ge.s32.totalorder %s9, 4
    %s19 = sphi 0, %s21
    %s22 = sphi 0, %s19
    %s23 = sphi 0, %s22
    %s39 = sphi 0, %s23
    %s43 = sphi 0, %s43
    %s45 = sphi 0, %s43
    %s46 = sphi 0, %s45
    %s60 = sphi 0, %s46
    %s64 = sphi 0, %s64
    %s66 = sphi 0, %s64
    %s67 = sphi 0, %s66
    %s81 = sphi 0, %s67
    %s87 = sphi 0, %s89
    %s90 = sphi 0, %s87
    %s91 = sphi 0, %s90
    %s107 = sphi 0, %s91
  $region4: #{_lambda_.1} parent=0 // loop_header_branch
    %12 = sbr.rel (%p10) target = $region8
  $region5: #{_lambda_.1} parent=0 // loop_body
    %s14 = ssub.s32 %s9, 1
    %s15 = ssub.s32 %s9, 2
    %s16 = sadd.s32 %s9, 1
    %s17 = ssub.s32 %s9, %s16
    %p18 = scmp.eq.s32.totalorder %s17, 0
    %s20 = sadd.s32 %s19, 1
    %s21 = scalar_select %p18, %s19, %s20
    %p24 = pneg %p18
    %p25 = scmp.eq.s32.totalorder %s9, 1
    %p26 = por %p24, %p25
    %p27 = scmp.ne.s32.totalorder %s19, %s22
    %p28 = scmp.eq.s32.totalorder %s9, 0
    %p29 = por %p27, %p28
    %p30 = scmp.ne.s32.totalorder %s19, %s22
    %p31 = scmp.eq.s32.totalorder %s14, 1
    %p32 = por %p30, %p31
    %p33 = scmp.ne.s32.totalorder %s22, %s23
    %p34 = scmp.eq.s32.totalorder %s14, 0
    %p35 = por %p33, %p34
    %p36 = scmp.ne.s32.totalorder %s22, %s23
    %p37 = scmp.eq.s32.totalorder %s15, 1
    %p38 = por %p36, %p37
    %p40 = scmp.ne.s32.totalorder %s23, %s39
    %p41 = scmp.eq.s32.totalorder %s15, 0
    %p42 = por %p40, %p41
    %s44 = sadd.s32 %s43, 1
    %p47 = scmp.eq.s32.totalorder %s9, 1
    %p48 = scmp.ne.s32.totalorder %s43, %s45
    %p49 = scmp.eq.s32.totalorder %s9, 0
    %p50 = por %p48, %p49
    %p51 = scmp.ne.s32.totalorder %s43, %s45
    %p52 = scmp.eq.s32.totalorder %s14, 1
    %p53 = por %p51, %p52
    %p54 = scmp.ne.s32.totalorder %s45, %s46
    %p55 = scmp.eq.s32.totalorder %s14, 0
    %p56 = por %p54, %p55
    %p57 = scmp.ne.s32.totalorder %s45, %s46
    %p58 = scmp.eq.s32.totalorder %s15, 1
    %p59 = por %p57, %p58
    %p61 = scmp.ne.s32.totalorder %s46, %s60
    %p62 = scmp.eq.s32.totalorder %s15, 0
    %p63 = por %p61, %p62
    %s65 = sadd.s32 %s64, 1
    %p68 = scmp.eq.s32.totalorder %s9, 1
    %p69 = scmp.ne.s32.totalorder %s64, %s66
    %p70 = scmp.eq.s32.totalorder %s9, 0
    %p71 = por %p69, %p70
    %p72 = scmp.ne.s32.totalorder %s64, %s66
    %p73 = scmp.eq.s32.totalorder %s14, 1
    %p74 = por %p72, %p73
    %p75 = scmp.ne.s32.totalorder %s66, %s67
    %p76 = scmp.eq.s32.totalorder %s14, 0
    %p77 = por %p75, %p76
    %p78 = scmp.ne.s32.totalorder %s66, %s67
    %p79 = scmp.eq.s32.totalorder %s15, 1
    %p80 = por %p78, %p79
    %p82 = scmp.ne.s32.totalorder %s67, %s81
    %p83 = scmp.eq.s32.totalorder %s15, 0
    %p84 = por %p82, %p83
    %s85 = ssub.s32 %s9, %s16
    %p86 = scmp.eq.s32.totalorder %s85, 0
    %s88 = sadd.s32 %s87, 1
    %s89 = scalar_select %p86, %s87, %s88
    %p92 = pneg %p86
    %p93 = scmp.eq.s32.totalorder %s9, 1
    %p94 = por %p92, %p93
    %p95 = scmp.ne.s32.totalorder %s87, %s90
    %p96 = scmp.eq.s32.totalorder %s9, 0
    %p97 = por %p95, %p96
    %p98 = scmp.ne.s32.totalorder %s87, %s90
    %p99 = scmp.eq.s32.totalorder %s14, 1
    %p100 = por %p98, %p99
    %p101 = scmp.ne.s32.totalorder %s90, %s91
    %p102 = scmp.eq.s32.totalorder %s14, 0
    %p103 = por %p101, %p102
    %p104 = scmp.ne.s32.totalorder %s90, %s91
    %p105 = scmp.eq.s32.totalorder %s15, 1
    %p106 = por %p104, %p105
    %p108 = scmp.ne.s32.totalorder %s91, %s107
    %p109 = scmp.eq.s32.totalorder %s15, 0
    %p110 = por %p108, %p109
    %p111 = scmp.le.s32.totalorder 1, %s9
    %p112 = scmp.lt.s32.totalorder %s9, 3
    %p113 = pnand %p111, %p112
    %p114 = pneg %p113
    // Predicated region
    $region9: #{_lambda_.1} parent=5 // pred_check
      _
    $region10: #{_lambda_.1} parent=5 // pred_check_branch
      %116 = sbr.rel (%p113) target = $region12
    $region11: #{_lambda_.1} parent=5 // pred_region
      %s117 = ssub.s32 %s9, 1
      // Predicated region
      $region13: #{_lambda_.1} parent=11 // pred_check
        %p118 = pneg %p56
      $region14: #{_lambda_.1} parent=11 // pred_check_branch
        %120 = sbr.rel (%p118) target = $region16
      $region15: #{_lambda_.1} parent=11 // pred_region
        _
      $region16: #{_lambda_.1} parent=11 // pred_fallthru
        _
      // Predicated region
      $region17: #{_lambda_.1} parent=11 // pred_check
        %p121 = pneg %p77
      $region18: #{_lambda_.1} parent=11 // pred_check_branch
        %123 = sbr.rel (%p121) target = $region20
      $region19: #{_lambda_.1} parent=11 // pred_region
        _
      $region20: #{_lambda_.1} parent=11 // pred_fallthru
        _
    $region12: #{_lambda_.1} parent=5 // pred_fallthru
      _
    %p124 = scmp.lt.s32.totalorder %s9, 2
    // Predicated region
    $region21: #{_lambda_.1} parent=5 // pred_check
      %p125 = pneg %p124
    $region22: #{_lambda_.1} parent=5 // pred_check_branch
      %127 = sbr.rel (%p125) target = $region24
    $region23: #{_lambda_.1} parent=5 // pred_region
      // Predicated region
      $region25: #{_lambda_.1} parent=23 // pred_check
        %p128 = pneg %p29
      $region26: #{_lambda_.1} parent=23 // pred_check_branch
        %130 = sbr.rel (%p128) target = $region28
      $region27: #{_lambda_.1} parent=23 // pred_region
        %p131 = scmp.lt.s32.totalorder %s9, 1
        %s132 = scalar_select %p131, %s9, 1
        %s133 = smul.addr %s132, 8
        %s134 = smul.addr %s133, 8
        %s135 = scalar_lea.vmem %s0, %s134
      $region28: #{_lambda_.1} parent=23 // pred_fallthru
        _
    $region24: #{_lambda_.1} parent=5 // pred_fallthru
      _
    %p136 = scmp.le.s32.totalorder 1, %s9
    %p137 = scmp.lt.s32.totalorder %s9, 3
    %p138 = pnand %p136, %p137
    %p139 = pneg %p138
    // Predicated region
    $region29: #{_lambda_.1} parent=5 // pred_check
      _
    $region30: #{_lambda_.1} parent=5 // pred_check_branch
      %141 = sbr.rel (%p138) target = $region32
    $region31: #{_lambda_.1} parent=5 // pred_region
      %s142 = ssub.s32 %s9, 1
      %p143 = scmp.lt.s32.totalorder %s14, 1
      %s144 = scalar_select %p143, %s14, 1
      %s145 = smul.addr %s144, 8
      %s146 = smul.addr %s145, 8
      %s147 = scalar_lea.vmem %s0, %s146
      %p148 = pneg %p35
      %p149 = pneg %p32
      %p150 = pneg %p56
      %p151 = pneg %p53
      %p152 = pneg %p77
      %p153 = pneg %p74
      %p154 = pneg %p103
      %p155 = pneg %p100
      %p156 = scmp.lt.s32.totalorder %s14, 1
      %s157 = scalar_select %p156, %s14, 1
      %s158 = smul.addr %s157, 8
      %s159 = scalar_lea.vmem %s3, %s158
      %p160 = scmp.lt.s32.totalorder %s14, 1
      %s161 = scalar_select %p160, %s14, 1
      %s162 = smul.addr %s161, 8
      %s163 = smul.addr %s162, 8
      %s164 = scalar_lea.vmem %s0, %s163
      %p165 = scmp.lt.s32.totalorder %s14, 1
      %s166 = scalar_select %p165, %s14, 1
      %s167 = smul.addr %s166, 8
      %s168 = scalar_lea.vmem %s3, %s167
      %v169 = vld [vmem:[%s164] sm:$0xff]
      %v170 = vld [vmem:[%s164 + $0x8] sm:$0xff]
      %v171 = vld [vmem:[%s164 + $0x10] sm:$0xff]
      %v172 = vld [vmem:[%s164 + $0x18] sm:$0xff]
      %v173 = vld [vmem:[%s164 + $0x20] sm:$0xf]
      %v174 = vld [vmem:[%s164 + $0x28] sm:$0xf]
      %v175 = vld [vmem:[%s164 + $0x30] sm:$0xf]
      %v176 = vld [vmem:[%s164 + $0x38] sm:$0xf]
      %v177 = vld [vmem:[%s1] sm:$0xff]
      %v178 = vld [vmem:[%s1 + $0x8] sm:$0xff]
      %180 = vset.pattern.permute.xlu0 12
      %181 = vperm.xlu0 %180, %v177
      %v182 = vpop.permute.xlu0 %181
      %185 = vset.pattern.permute.xlu0 12
      %186 = vperm.xlu0 %185, %v178
      %v187 = vpop.permute.xlu0 %186
      %vm189 = vcmask 97280
      %v190 = vsel %vm189, %v177, 0
      %v192 = vsel %vm189, %v178, 0
      %vm194 = vcmask 1043456
      %v196 = vsel %vm194, %v173, 0
      %v199 = vsel %vm194, %v174, 0
      %v202 = vsel %vm194, %v175, 0
      %v205 = vsel %vm194, %v176, 0
      %207 = vmatpush.msra.mxu0 0.0
      %208 = vmatpush.msra.mxu0 0.0
      %209 = vmatpush.msra.mxu0 0.0
      %210 = vmatpush.msra.mxu0 0.0
      %211 = vmatpush.msra.mxu0 0.0
      %212 = vmatpush.msra.mxu0 0.0
      %213 = vmatpush.msra.mxu0 0.0
      %214 = vmatpush.msra.mxu0 0.0
      %215 = vmatpush.msra.mxu0 0.0
      %216 = vmatpush.msra.mxu0 0.0
      %217 = vmatpush.msra.mxu0 0.0
      %218 = vmatpush.msra.mxu0 0.0
      %219 = vmatpush.msra.mxu0 0.0
      %220 = vmatpush.msra.mxu0 0.0
      %v221 = vand.u32 %v196, 4294901760
      %222 = vmatpush.msra.mxu0 %v221
      %v223 = vand.u32 %v169, 4294901760
      %224 = vmatpush.msra.mxu0 %v223
      %v225 = vand.u32 %v190, 4294901760
      %v226 = vsub.f32 %v190, %v225
      %v227 = vand.u32 %v226, 4294901760
      %v228 = vsub.f32 %v226, %v227
      %v229 = vand.u32 %v228, 4294901760
      %230 = vmatmul.f32.gmra.mxu0 %v229
      %v231 = vpop.f32.mrf.mxu0
      %v232 = vadd.f32 %v182, %v231
      %v233 = vand.u32 %v192, 4294901760
      %v234 = vsub.f32 %v192, %v233
      %v235 = vand.u32 %v234, 4294901760
      %v236 = vsub.f32 %v234, %v235
      %v237 = vand.u32 %v236, 4294901760
      %238 = vmatmul.f32.gmra.mxu0 %v237
      %v239 = vpop.f32.mrf.mxu0
      %v240 = vadd.f32 %v187, %v239
      %241 = vdwg.mxu0
      %242 = vmatpush.msra.mxu0 0.0
      %243 = vmatpush.msra.mxu0 0.0
      %244 = vmatpush.msra.mxu0 0.0
      %245 = vmatpush.msra.mxu0 0.0
      %246 = vmatpush.msra.mxu0 0.0
      %247 = vmatpush.msra.mxu0 0.0
      %248 = vmatpush.msra.mxu0 0.0
      %249 = vmatpush.msra.mxu0 0.0
      %250 = vmatpush.msra.mxu0 0.0
      %251 = vmatpush.msra.mxu0 0.0
      %252 = vmatpush.msra.mxu0 0.0
      %253 = vmatpush.msra.mxu0 0.0
      %254 = vmatpush.msra.mxu0 0.0
      %255 = vmatpush.msra.mxu0 0.0
      %v256 = vand.u32 %v196, 4294901760
      %v257 = vsub.f32 %v196, %v256
      %v258 = vand.u32 %v257, 4294901760
      %v259 = vsub.f32 %v257, %v258
      %v260 = vand.u32 %v259, 4294901760
      %261 = vmatpush.msra.mxu0 %v260
      %v262 = vand.u32 %v169, 4294901760
      %v263 = vsub.f32 %v169, %v262
      %v264 = vand.u32 %v263, 4294901760
      %v265 = vsub.f32 %v263, %v264
      %v266 = vand.u32 %v265, 4294901760
      %267 = vmatpush.msra.mxu0 %v266
      %v268 = vand.u32 %v190, 4294901760
      %269 = vmatmul.f32.gmra.mxu0 %v268
      %v270 = vpop.f32.mrf.mxu0
      %v271 = vadd.f32 %v232, %v270
      %v272 = vand.u32 %v192, 4294901760
      %273 = vmatmul.f32.gmra.mxu0 %v272
      %v274 = vpop.f32.mrf.mxu0
      %v275 = vadd.f32 %v240, %v274
      %276 = vdwg.mxu0
      %277 = vmatpush.msra.mxu0 0.0
      %278 = vmatpush.msra.mxu0 0.0
      %279 = vmatpush.msra.mxu0 0.0
      %280 = vmatpush.msra.mxu0 0.0
      %281 = vmatpush.msra.mxu0 0.0
      %282 = vmatpush.msra.mxu0 0.0
      %283 = vmatpush.msra.mxu0 0.0
      %284 = vmatpush.msra.mxu0 0.0
      %285 = vmatpush.msra.mxu0 0.0
      %286 = vmatpush.msra.mxu0 0.0
      %287 = vmatpush.msra.mxu0 0.0
      %288 = vmatpush.msra.mxu0 0.0
      %289 = vmatpush.msra.mxu0 0.0
      %290 = vmatpush.msra.mxu0 0.0
      %v291 = vand.u32 %v196, 4294901760
      %v292 = vsub.f32 %v196, %v291
      %293 = vmatpush.msra.mxu0 %v292
      %v294 = vand.u32 %v169, 4294901760
      %v295 = vsub.f32 %v169, %v294
      %296 = vmatpush.msra.mxu0 %v295
      %v297 = vand.u32 %v190, 4294901760
      %v298 = vsub.f32 %v190, %v297
      %299 = vmatmul.f32.gmra.mxu0 %v298
      %v300 = vpop.f32.mrf.mxu0
      %v301 = vadd.f32 %v271, %v300
      %v302 = vand.u32 %v192, 4294901760
      %v303 = vsub.f32 %v192, %v302
      %304 = vmatmul.f32.gmra.mxu0 %v303
      %v305 = vpop.f32.mrf.mxu0
      %v306 = vadd.f32 %v275, %v305
      %307 = vdwg.mxu0
      %308 = vmatpush.msra.mxu0 0.0
      %309 = vmatpush.msra.mxu0 0.0
      %310 = vmatpush.msra.mxu0 0.0
      %311 = vmatpush.msra.mxu0 0.0
      %312 = vmatpush.msra.mxu0 0.0
      %313 = vmatpush.msra.mxu0 0.0
      %314 = vmatpush.msra.mxu0 0.0
      %315 = vmatpush.msra.mxu0 0.0
      %316 = vmatpush.msra.mxu0 0.0
      %317 = vmatpush.msra.mxu0 0.0
      %318 = vmatpush.msra.mxu0 0.0
      %319 = vmatpush.msra.mxu0 0.0
      %320 = vmatpush.msra.mxu0 0.0
      %321 = vmatpush.msra.mxu0 0.0
      %v322 = vand.u32 %v196, 4294901760
      %323 = vmatpush.msra.mxu0 %v322
      %v324 = vand.u32 %v169, 4294901760
      %325 = vmatpush.msra.mxu0 %v324
      %v326 = vand.u32 %v190, 4294901760
      %v327 = vsub.f32 %v190, %v326
      %v328 = vand.u32 %v327, 4294901760
      %329 = vmatmul.f32.gmra.mxu0 %v328
      %v330 = vpop.f32.mrf.mxu0
      %v331 = vadd.f32 %v301, %v330
      %v332 = vand.u32 %v192, 4294901760
      %v333 = vsub.f32 %v192, %v332
      %v334 = vand.u32 %v333, 4294901760
      %335 = vmatmul.f32.gmra.mxu0 %v334
      %v336 = vpop.f32.mrf.mxu0
      %v337 = vadd.f32 %v306, %v336
      %338 = vdwg.mxu0
      %339 = vmatpush.msra.mxu0 0.0
      %340 = vmatpush.msra.mxu0 0.0
      %341 = vmatpush.msra.mxu0 0.0
      %342 = vmatpush.msra.mxu0 0.0
      %343 = vmatpush.msra.mxu0 0.0
      %344 = vmatpush.msra.mxu0 0.0
      %345 = vmatpush.msra.mxu0 0.0
      %346 = vmatpush.msra.mxu0 0.0
      %347 = vmatpush.msra.mxu0 0.0
      %348 = vmatpush.msra.mxu0 0.0
      %349 = vmatpush.msra.mxu0 0.0
      %350 = vmatpush.msra.mxu0 0.0
      %351 = vmatpush.msra.mxu0 0.0
      %352 = vmatpush.msra.mxu0 0.0
      %v353 = vand.u32 %v196, 4294901760
      %v354 = vsub.f32 %v196, %v353
      %v355 = vand.u32 %v354, 4294901760
      %356 = vmatpush.msra.mxu0 %v355
      %v357 = vand.u32 %v169, 4294901760
      %v358 = vsub.f32 %v169, %v357
      %v359 = vand.u32 %v358, 4294901760
      %360 = vmatpush.msra.mxu0 %v359
      %v361 = vand.u32 %v190, 4294901760
      %362 = vmatmul.f32.gmra.mxu0 %v361
      %v363 = vpop.f32.mrf.mxu0
      %v364 = vadd.f32 %v331, %v363
      %v365 = vand.u32 %v192, 4294901760
      %366 = vmatmul.f32.gmra.mxu0 %v365
      %v367 = vpop.f32.mrf.mxu0
      %v368 = vadd.f32 %v337, %v367
      %369 = vdwg.mxu0
      %370 = vmatpush.msra.mxu0 0.0
      %371 = vmatpush.msra.mxu0 0.0
      %372 = vmatpush.msra.mxu0 0.0
      %373 = vmatpush.msra.mxu0 0.0
      %374 = vmatpush.msra.mxu0 0.0
      %375 = vmatpush.msra.mxu0 0.0
      %376 = vmatpush.msra.mxu0 0.0
      %377 = vmatpush.msra.mxu0 0.0
      %378 = vmatpush.msra.mxu0 0.0
      %379 = vmatpush.msra.mxu0 0.0
      %380 = vmatpush.msra.mxu0 0.0
      %381 = vmatpush.msra.mxu0 0.0
      %382 = vmatpush.msra.mxu0 0.0
      %383 = vmatpush.msra.mxu0 0.0
      %v384 = vand.u32 %v196, 4294901760
      %385 = vmatpush.msra.mxu0 %v384
      %v386 = vand.u32 %v169, 4294901760
      %387 = vmatpush.msra.mxu0 %v386
      %v388 = vand.u32 %v190, 4294901760
      %389 = vmatmul.f32.gmra.mxu0 %v388
      %v390 = vpop.f32.mrf.mxu0
      %v391 = vadd.f32 %v364, %v390
      %v392 = vand.u32 %v192, 4294901760
      %393 = vmatmul.f32.gmra.mxu0 %v392
      %v394 = vpop.f32.mrf.mxu0
      %v395 = vadd.f32 %v368, %v394
      %396 = vdwg.mxu0
      %397 = vmatpush.msra.mxu0 0.0
      %398 = vmatpush.msra.mxu0 0.0
      %399 = vmatpush.msra.mxu0 0.0
      %400 = vmatpush.msra.mxu0 0.0
      %401 = vmatpush.msra.mxu0 0.0
      %402 = vmatpush.msra.mxu0 0.0
      %403 = vmatpush.msra.mxu0 0.0
      %404 = vmatpush.msra.mxu0 0.0
      %405 = vmatpush.msra.mxu0 0.0
      %406 = vmatpush.msra.mxu0 0.0
      %407 = vmatpush.msra.mxu0 0.0
      %408 = vmatpush.msra.mxu0 0.0
      %409 = vmatpush.msra.mxu0 0.0
      %410 = vmatpush.msra.mxu0 0.0
      %v411 = vand.u32 %v199, 4294901760
      %412 = vmatpush.msra.mxu0 %v411
      %v413 = vand.u32 %v170, 4294901760
      %414 = vmatpush.msra.mxu0 %v413
      %v415 = vand.u32 %v190, 4294901760
      %v416 = vsub.f32 %v190, %v415
      %v417 = vand.u32 %v416, 4294901760
      %v418 = vsub.f32 %v416, %v417
      %v419 = vand.u32 %v418, 4294901760
      %420 = vmatmul.f32.gmra.mxu0 %v419
      %v421 = vpop.f32.mrf.mxu0
      %v422 = vadd.f32 %v182, %v421
      %v423 = vand.u32 %v192, 4294901760
      %v424 = vsub.f32 %v192, %v423
      %v425 = vand.u32 %v424, 4294901760
      %v426 = vsub.f32 %v424, %v425
      %v427 = vand.u32 %v426, 4294901760
      %428 = vmatmul.f32.gmra.mxu0 %v427
      %v429 = vpop.f32.mrf.mxu0
      %v430 = vadd.f32 %v187, %v429
      %431 = vdwg.mxu0
      %432 = vmatpush.msra.mxu0 0.0
      %433 = vmatpush.msra.mxu0 0.0
      %434 = vmatpush.msra.mxu0 0.0
      %435 = vmatpush.msra.mxu0 0.0
      %436 = vmatpush.msra.mxu0 0.0
      %437 = vmatpush.msra.mxu0 0.0
      %438 = vmatpush.msra.mxu0 0.0
      %439 = vmatpush.msra.mxu0 0.0
      %440 = vmatpush.msra.mxu0 0.0
      %441 = vmatpush.msra.mxu0 0.0
      %442 = vmatpush.msra.mxu0 0.0
      %443 = vmatpush.msra.mxu0 0.0
      %444 = vmatpush.msra.mxu0 0.0
      %445 = vmatpush.msra.mxu0 0.0
      %v446 = vand.u32 %v199, 4294901760
      %v447 = vsub.f32 %v199, %v446
      %v448 = vand.u32 %v447, 4294901760
      %v449 = vsub.f32 %v447, %v448
      %v450 = vand.u32 %v449, 4294901760
      %451 = vmatpush.msra.mxu0 %v450
      %v452 = vand.u32 %v170, 4294901760
      %v453 = vsub.f32 %v170, %v452
      %v454 = vand.u32 %v453, 4294901760
      %v455 = vsub.f32 %v453, %v454
      %v456 = vand.u32 %v455, 4294901760
      %457 = vmatpush.msra.mxu0 %v456
      %v458 = vand.u32 %v190, 4294901760
      %459 = vmatmul.f32.gmra.mxu0 %v458
      %v460 = vpop.f32.mrf.mxu0
      %v461 = vadd.f32 %v422, %v460
      %v462 = vand.u32 %v192, 4294901760
      %463 = vmatmul.f32.gmra.mxu0 %v462
      %v464 = vpop.f32.mrf.mxu0
      %v465 = vadd.f32 %v430, %v464
      %466 = vdwg.mxu0
      %467 = vmatpush.msra.mxu0 0.0
      %468 = vmatpush.msra.mxu0 0.0
      %469 = vmatpush.msra.mxu0 0.0
      %470 = vmatpush.msra.mxu0 0.0
      %471 = vmatpush.msra.mxu0 0.0
      %472 = vmatpush.msra.mxu0 0.0
      %473 = vmatpush.msra.mxu0 0.0
      %474 = vmatpush.msra.mxu0 0.0
      %475 = vmatpush.msra.mxu0 0.0
      %476 = vmatpush.msra.mxu0 0.0
      %477 = vmatpush.msra.mxu0 0.0
      %478 = vmatpush.msra.mxu0 0.0
      %479 = vmatpush.msra.mxu0 0.0
      %480 = vmatpush.msra.mxu0 0.0
      %v481 = vand.u32 %v199, 4294901760
      %v482 = vsub.f32 %v199, %v481
      %483 = vmatpush.msra.mxu0 %v482
      %v484 = vand.u32 %v170, 4294901760
      %v485 = vsub.f32 %v170, %v484
      %486 = vmatpush.msra.mxu0 %v485
      %v487 = vand.u32 %v190, 4294901760
      %v488 = vsub.f32 %v190, %v487
      %489 = vmatmul.f32.gmra.mxu0 %v488
      %v490 = vpop.f32.mrf.mxu0
      %v491 = vadd.f32 %v461, %v490
      %v492 = vand.u32 %v192, 4294901760
      %v493 = vsub.f32 %v192, %v492
      %494 = vmatmul.f32.gmra.mxu0 %v493
      %v495 = vpop.f32.mrf.mxu0
      %v496 = vadd.f32 %v465, %v495
      %497 = vdwg.mxu0
      %498 = vmatpush.msra.mxu0 0.0
      %499 = vmatpush.msra.mxu0 0.0
      %500 = vmatpush.msra.mxu0 0.0
      %501 = vmatpush.msra.mxu0 0.0
      %502 = vmatpush.msra.mxu0 0.0
      %503 = vmatpush.msra.mxu0 0.0
      %504 = vmatpush.msra.mxu0 0.0
      %505 = vmatpush.msra.mxu0 0.0
      %506 = vmatpush.msra.mxu0 0.0
      %507 = vmatpush.msra.mxu0 0.0
      %508 = vmatpush.msra.mxu0 0.0
      %509 = vmatpush.msra.mxu0 0.0
      %510 = vmatpush.msra.mxu0 0.0
      %511 = vmatpush.msra.mxu0 0.0
      %v512 = vand.u32 %v199, 4294901760
      %513 = vmatpush.msra.mxu0 %v512
      %v514 = vand.u32 %v170, 4294901760
      %515 = vmatpush.msra.mxu0 %v514
      %v516 = vand.u32 %v190, 4294901760
      %v517 = vsub.f32 %v190, %v516
      %v518 = vand.u32 %v517, 4294901760
      %519 = vmatmul.f32.gmra.mxu0 %v518
      %v520 = vpop.f32.mrf.mxu0
      %v521 = vadd.f32 %v491, %v520
      %v522 = vand.u32 %v192, 4294901760
      %v523 = vsub.f32 %v192, %v522
      %v524 = vand.u32 %v523, 4294901760
      %525 = vmatmul.f32.gmra.mxu0 %v524
      %v526 = vpop.f32.mrf.mxu0
      %v527 = vadd.f32 %v496, %v526
      %528 = vdwg.mxu0
      %529 = vmatpush.msra.mxu0 0.0
      %530 = vmatpush.msra.mxu0 0.0
      %531 = vmatpush.msra.mxu0 0.0
      %532 = vmatpush.msra.mxu0 0.0
      %533 = vmatpush.msra.mxu0 0.0
      %534 = vmatpush.msra.mxu0 0.0
      %535 = vmatpush.msra.mxu0 0.0
      %536 = vmatpush.msra.mxu0 0.0
      %537 = vmatpush.msra.mxu0 0.0
      %538 = vmatpush.msra.mxu0 0.0
      %539 = vmatpush.msra.mxu0 0.0
      %540 = vmatpush.msra.mxu0 0.0
      %541 = vmatpush.msra.mxu0 0.0
      %542 = vmatpush.msra.mxu0 0.0
      %v543 = vand.u32 %v199, 4294901760
      %v544 = vsub.f32 %v199, %v543
      %v545 = vand.u32 %v544, 4294901760
      %546 = vmatpush.msra.mxu0 %v545
      %v547 = vand.u32 %v170, 4294901760
      %v548 = vsub.f32 %v170, %v547
      %v549 = vand.u32 %v548, 4294901760
      %550 = vmatpush.msra.mxu0 %v549
      %v551 = vand.u32 %v190, 4294901760
      %552 = vmatmul.f32.gmra.mxu0 %v551
      %v553 = vpop.f32.mrf.mxu0
      %v554 = vadd.f32 %v521, %v553
      %v555 = vand.u32 %v192, 4294901760
      %556 = vmatmul.f32.gmra.mxu0 %v555
      %v557 = vpop.f32.mrf.mxu0
      %v558 = vadd.f32 %v527, %v557
      %559 = vdwg.mxu0
      %560 = vmatpush.msra.mxu0 0.0
      %561 = vmatpush.msra.mxu0 0.0
      %562 = vmatpush.msra.mxu0 0.0
      %563 = vmatpush.msra.mxu0 0.0
      %564 = vmatpush.msra.mxu0 0.0
      %565 = vmatpush.msra.mxu0 0.0
      %566 = vmatpush.msra.mxu0 0.0
      %567 = vmatpush.msra.mxu0 0.0
      %568 = vmatpush.msra.mxu0 0.0
      %569 = vmatpush.msra.mxu0 0.0
      %570 = vmatpush.msra.mxu0 0.0
      %571 = vmatpush.msra.mxu0 0.0
      %572 = vmatpush.msra.mxu0 0.0
      %573 = vmatpush.msra.mxu0 0.0
      %v574 = vand.u32 %v199, 4294901760
      %575 = vmatpush.msra.mxu0 %v574
      %v576 = vand.u32 %v170, 4294901760
      %577 = vmatpush.msra.mxu0 %v576
      %v578 = vand.u32 %v190, 4294901760
      %579 = vmatmul.f32.gmra.mxu0 %v578
      %v580 = vpop.f32.mrf.mxu0
      %v581 = vadd.f32 %v554, %v580
      %v582 = vand.u32 %v192, 4294901760
      %583 = vmatmul.f32.gmra.mxu0 %v582
      %v584 = vpop.f32.mrf.mxu0
      %v585 = vadd.f32 %v558, %v584
      %586 = vdwg.mxu0
      %587 = vmatpush.msra.mxu0 0.0
      %588 = vmatpush.msra.mxu0 0.0
      %589 = vmatpush.msra.mxu0 0.0
      %590 = vmatpush.msra.mxu0 0.0
      %591 = vmatpush.msra.mxu0 0.0
      %592 = vmatpush.msra.mxu0 0.0
      %593 = vmatpush.msra.mxu0 0.0
      %594 = vmatpush.msra.mxu0 0.0
      %595 = vmatpush.msra.mxu0 0.0
      %596 = vmatpush.msra.mxu0 0.0
      %597 = vmatpush.msra.mxu0 0.0
      %598 = vmatpush.msra.mxu0 0.0
      %599 = vmatpush.msra.mxu0 0.0
      %600 = vmatpush.msra.mxu0 0.0
      %v601 = vand.u32 %v202, 4294901760
      %602 = vmatpush.msra.mxu0 %v601
      %v603 = vand.u32 %v171, 4294901760
      %604 = vmatpush.msra.mxu0 %v603
      %v605 = vand.u32 %v190, 4294901760
      %v606 = vsub.f32 %v190, %v605
      %v607 = vand.u32 %v606, 4294901760
      %v608 = vsub.f32 %v606, %v607
      %v609 = vand.u32 %v608, 4294901760
      %610 = vmatmul.f32.gmra.mxu0 %v609
      %v611 = vpop.f32.mrf.mxu0
      %v612 = vadd.f32 %v182, %v611
      %v613 = vand.u32 %v192, 4294901760
      %v614 = vsub.f32 %v192, %v613
      %v615 = vand.u32 %v614, 4294901760
      %v616 = vsub.f32 %v614, %v615
      %v617 = vand.u32 %v616, 4294901760
      %618 = vmatmul.f32.gmra.mxu0 %v617
      %v619 = vpop.f32.mrf.mxu0
      %v620 = vadd.f32 %v187, %v619
      %621 = vdwg.mxu0
      %622 = vmatpush.msra.mxu0 0.0
      %623 = vmatpush.msra.mxu0 0.0
      %624 = vmatpush.msra.mxu0 0.0
      %625 = vmatpush.msra.mxu0 0.0
      %626 = vmatpush.msra.mxu0 0.0
      %627 = vmatpush.msra.mxu0 0.0
      %628 = vmatpush.msra.mxu0 0.0
      %629 = vmatpush.msra.mxu0 0.0
      %630 = vmatpush.msra.mxu0 0.0
      %631 = vmatpush.msra.mxu0 0.0
      %632 = vmatpush.msra.mxu0 0.0
      %633 = vmatpush.msra.mxu0 0.0
      %634 = vmatpush.msra.mxu0 0.0
      %635 = vmatpush.msra.mxu0 0.0
      %v636 = vand.u32 %v202, 4294901760
      %v637 = vsub.f32 %v202, %v636
      %v638 = vand.u32 %v637, 4294901760
      %v639 = vsub.f32 %v637, %v638
      %v640 = vand.u32 %v639, 4294901760
      %641 = vmatpush.msra.mxu0 %v640
      %v642 = vand.u32 %v171, 4294901760
      %v643 = vsub.f32 %v171, %v642
      %v644 = vand.u32 %v643, 4294901760
      %v645 = vsub.f32 %v643, %v644
      %v646 = vand.u32 %v645, 4294901760
      %647 = vmatpush.msra.mxu0 %v646
      %v648 = vand.u32 %v190, 4294901760
      %649 = vmatmul.f32.gmra.mxu0 %v648
      %v650 = vpop.f32.mrf.mxu0
      %v651 = vadd.f32 %v612, %v650
      %v652 = vand.u32 %v192, 4294901760
      %653 = vmatmul.f32.gmra.mxu0 %v652
      %v654 = vpop.f32.mrf.mxu0
      %v655 = vadd.f32 %v620, %v654
      %656 = vdwg.mxu0
      %657 = vmatpush.msra.mxu0 0.0
      %658 = vmatpush.msra.mxu0 0.0
      %659 = vmatpush.msra.mxu0 0.0
      %660 = vmatpush.msra.mxu0 0.0
      %661 = vmatpush.msra.mxu0 0.0
      %662 = vmatpush.msra.mxu0 0.0
      %663 = vmatpush.msra.mxu0 0.0
      %664 = vmatpush.msra.mxu0 0.0
      %665 = vmatpush.msra.mxu0 0.0
      %666 = vmatpush.msra.mxu0 0.0
      %667 = vmatpush.msra.mxu0 0.0
      %668 = vmatpush.msra.mxu0 0.0
      %669 = vmatpush.msra.mxu0 0.0
      %670 = vmatpush.msra.mxu0 0.0
      %v671 = vand.u32 %v202, 4294901760
      %v672 = vsub.f32 %v202, %v671
      %673 = vmatpush.msra.mxu0 %v672
      %v674 = vand.u32 %v171, 4294901760
      %v675 = vsub.f32 %v171, %v674
      %676 = vmatpush.msra.mxu0 %v675
      %v677 = vand.u32 %v190, 4294901760
      %v678 = vsub.f32 %v190, %v677
      %679 = vmatmul.f32.gmra.mxu0 %v678
      %v680 = vpop.f32.mrf.mxu0
      %v681 = vadd.f32 %v651, %v680
      %v682 = vand.u32 %v192, 4294901760
      %v683 = vsub.f32 %v192, %v682
      %684 = vmatmul.f32.gmra.mxu0 %v683
      %v685 = vpop.f32.mrf.mxu0
      %v686 = vadd.f32 %v655, %v685
      %687 = vdwg.mxu0
      %688 = vmatpush.msra.mxu0 0.0
      %689 = vmatpush.msra.mxu0 0.0
      %690 = vmatpush.msra.mxu0 0.0
      %691 = vmatpush.msra.mxu0 0.0
      %692 = vmatpush.msra.mxu0 0.0
      %693 = vmatpush.msra.mxu0 0.0
      %694 = vmatpush.msra.mxu0 0.0
      %695 = vmatpush.msra.mxu0 0.0
      %696 = vmatpush.msra.mxu0 0.0
      %697 = vmatpush.msra.mxu0 0.0
      %698 = vmatpush.msra.mxu0 0.0
      %699 = vmatpush.msra.mxu0 0.0
      %700 = vmatpush.msra.mxu0 0.0
      %701 = vmatpush.msra.mxu0 0.0
      %v702 = vand.u32 %v202, 4294901760
      %703 = vmatpush.msra.mxu0 %v702
      %v704 = vand.u32 %v171, 4294901760
      %705 = vmatpush.msra.mxu0 %v704
      %v706 = vand.u32 %v190, 4294901760
      %v707 = vsub.f32 %v190, %v706
      %v708 = vand.u32 %v707, 4294901760
      %709 = vmatmul.f32.gmra.mxu0 %v708
      %v710 = vpop.f32.mrf.mxu0
      %v711 = vadd.f32 %v681, %v710
      %v712 = vand.u32 %v192, 4294901760
      %v713 = vsub.f32 %v192, %v712
      %v714 = vand.u32 %v713, 4294901760
      %715 = vmatmul.f32.gmra.mxu0 %v714
      %v716 = vpop.f32.mrf.mxu0
      %v717 = vadd.f32 %v686, %v716
      %718 = vdwg.mxu0
      %719 = vmatpush.msra.mxu0 0.0
      %720 = vmatpush.msra.mxu0 0.0
      %721 = vmatpush.msra.mxu0 0.0
      %722 = vmatpush.msra.mxu0 0.0
      %723 = vmatpush.msra.mxu0 0.0
      %724 = vmatpush.msra.mxu0 0.0
      %725 = vmatpush.msra.mxu0 0.0
      %726 = vmatpush.msra.mxu0 0.0
      %727 = vmatpush.msra.mxu0 0.0
      %728 = vmatpush.msra.mxu0 0.0
      %729 = vmatpush.msra.mxu0 0.0
      %730 = vmatpush.msra.mxu0 0.0
      %731 = vmatpush.msra.mxu0 0.0
      %732 = vmatpush.msra.mxu0 0.0
      %v733 = vand.u32 %v202, 4294901760
      %v734 = vsub.f32 %v202, %v733
      %v735 = vand.u32 %v734, 4294901760
      %736 = vmatpush.msra.mxu0 %v735
      %v737 = vand.u32 %v171, 4294901760
      %v738 = vsub.f32 %v171, %v737
      %v739 = vand.u32 %v738, 4294901760
      %740 = vmatpush.msra.mxu0 %v739
      %v741 = vand.u32 %v190, 4294901760
      %742 = vmatmul.f32.gmra.mxu0 %v741
      %v743 = vpop.f32.mrf.mxu0
      %v744 = vadd.f32 %v711, %v743
      %v745 = vand.u32 %v192, 4294901760
      %746 = vmatmul.f32.gmra.mxu0 %v745
      %v747 = vpop.f32.mrf.mxu0
      %v748 = vadd.f32 %v717, %v747
      %749 = vdwg.mxu0
      %750 = vmatpush.msra.mxu0 0.0
      %751 = vmatpush.msra.mxu0 0.0
      %752 = vmatpush.msra.mxu0 0.0
      %753 = vmatpush.msra.mxu0 0.0
      %754 = vmatpush.msra.mxu0 0.0
      %755 = vmatpush.msra.mxu0 0.0
      %756 = vmatpush.msra.mxu0 0.0
      %757 = vmatpush.msra.mxu0 0.0
      %758 = vmatpush.msra.mxu0 0.0
      %759 = vmatpush.msra.mxu0 0.0
      %760 = vmatpush.msra.mxu0 0.0
      %761 = vmatpush.msra.mxu0 0.0
      %762 = vmatpush.msra.mxu0 0.0
      %763 = vmatpush.msra.mxu0 0.0
      %v764 = vand.u32 %v202, 4294901760
      %765 = vmatpush.msra.mxu0 %v764
      %v766 = vand.u32 %v171, 4294901760
      %767 = vmatpush.msra.mxu0 %v766
      %v768 = vand.u32 %v190, 4294901760
      %769 = vmatmul.f32.gmra.mxu0 %v768
      %v770 = vpop.f32.mrf.mxu0
      %v771 = vadd.f32 %v744, %v770
      %v772 = vand.u32 %v192, 4294901760
      %773 = vmatmul.f32.gmra.mxu0 %v772
      %v774 = vpop.f32.mrf.mxu0
      %v775 = vadd.f32 %v748, %v774
      %776 = vdwg.mxu0
      %777 = vmatpush.msra.mxu0 0.0
      %778 = vmatpush.msra.mxu0 0.0
      %779 = vmatpush.msra.mxu0 0.0
      %780 = vmatpush.msra.mxu0 0.0
      %781 = vmatpush.msra.mxu0 0.0
      %782 = vmatpush.msra.mxu0 0.0
      %783 = vmatpush.msra.mxu0 0.0
      %784 = vmatpush.msra.mxu0 0.0
      %785 = vmatpush.msra.mxu0 0.0
      %786 = vmatpush.msra.mxu0 0.0
      %787 = vmatpush.msra.mxu0 0.0
      %788 = vmatpush.msra.mxu0 0.0
      %789 = vmatpush.msra.mxu0 0.0
      %790 = vmatpush.msra.mxu0 0.0
      %v791 = vand.u32 %v205, 4294901760
      %792 = vmatpush.msra.mxu0 %v791
      %v793 = vand.u32 %v172, 4294901760
      %794 = vmatpush.msra.mxu0 %v793
      %v795 = vand.u32 %v190, 4294901760
      %v796 = vsub.f32 %v190, %v795
      %v797 = vand.u32 %v796, 4294901760
      %v798 = vsub.f32 %v796, %v797
      %v799 = vand.u32 %v798, 4294901760
      %800 = vmatmul.f32.gmra.mxu0 %v799
      %v801 = vpop.f32.mrf.mxu0
      %v802 = vadd.f32 %v182, %v801
      %v803 = vand.u32 %v192, 4294901760
      %v804 = vsub.f32 %v192, %v803
      %v805 = vand.u32 %v804, 4294901760
      %v806 = vsub.f32 %v804, %v805
      %v807 = vand.u32 %v806, 4294901760
      %808 = vmatmul.f32.gmra.mxu0 %v807
      %v809 = vpop.f32.mrf.mxu0
      %v810 = vadd.f32 %v187, %v809
      %811 = vdwg.mxu0
      %812 = vmatpush.msra.mxu0 0.0
      %813 = vmatpush.msra.mxu0 0.0
      %814 = vmatpush.msra.mxu0 0.0
      %815 = vmatpush.msra.mxu0 0.0
      %816 = vmatpush.msra.mxu0 0.0
      %817 = vmatpush.msra.mxu0 0.0
      %818 = vmatpush.msra.mxu0 0.0
      %819 = vmatpush.msra.mxu0 0.0
      %820 = vmatpush.msra.mxu0 0.0
      %821 = vmatpush.msra.mxu0 0.0
      %822 = vmatpush.msra.mxu0 0.0
      %823 = vmatpush.msra.mxu0 0.0
      %824 = vmatpush.msra.mxu0 0.0
      %825 = vmatpush.msra.mxu0 0.0
      %v826 = vand.u32 %v205, 4294901760
      %v827 = vsub.f32 %v205, %v826
      %v828 = vand.u32 %v827, 4294901760
      %v829 = vsub.f32 %v827, %v828
      %v830 = vand.u32 %v829, 4294901760
      %831 = vmatpush.msra.mxu0 %v830
      %v832 = vand.u32 %v172, 4294901760
      %v833 = vsub.f32 %v172, %v832
      %v834 = vand.u32 %v833, 4294901760
      %v835 = vsub.f32 %v833, %v834
      %v836 = vand.u32 %v835, 4294901760
      %837 = vmatpush.msra.mxu0 %v836
      %v838 = vand.u32 %v190, 4294901760
      %839 = vmatmul.f32.gmra.mxu0 %v838
      %v840 = vpop.f32.mrf.mxu0
      %v841 = vadd.f32 %v802, %v840
      %v842 = vand.u32 %v192, 4294901760
      %843 = vmatmul.f32.gmra.mxu0 %v842
      %v844 = vpop.f32.mrf.mxu0
      %v845 = vadd.f32 %v810, %v844
      %846 = vdwg.mxu0
      %847 = vmatpush.msra.mxu0 0.0
      %848 = vmatpush.msra.mxu0 0.0
      %849 = vmatpush.msra.mxu0 0.0
      %850 = vmatpush.msra.mxu0 0.0
      %851 = vmatpush.msra.mxu0 0.0
      %852 = vmatpush.msra.mxu0 0.0
      %853 = vmatpush.msra.mxu0 0.0
      %854 = vmatpush.msra.mxu0 0.0
      %855 = vmatpush.msra.mxu0 0.0
      %856 = vmatpush.msra.mxu0 0.0
      %857 = vmatpush.msra.mxu0 0.0
      %858 = vmatpush.msra.mxu0 0.0
      %859 = vmatpush.msra.mxu0 0.0
      %860 = vmatpush.msra.mxu0 0.0
      %v861 = vand.u32 %v205, 4294901760
      %v862 = vsub.f32 %v205, %v861
      %863 = vmatpush.msra.mxu0 %v862
      %v864 = vand.u32 %v172, 4294901760
      %v865 = vsub.f32 %v172, %v864
      %866 = vmatpush.msra.mxu0 %v865
      %v867 = vand.u32 %v190, 4294901760
      %v868 = vsub.f32 %v190, %v867
      %869 = vmatmul.f32.gmra.mxu0 %v868
      %v870 = vpop.f32.mrf.mxu0
      %v871 = vadd.f32 %v841, %v870
      %v872 = vand.u32 %v192, 4294901760
      %v873 = vsub.f32 %v192, %v872
      %874 = vmatmul.f32.gmra.mxu0 %v873
      %v875 = vpop.f32.mrf.mxu0
      %v876 = vadd.f32 %v845, %v875
      %877 = vdwg.mxu0
      %878 = vmatpush.msra.mxu0 0.0
      %879 = vmatpush.msra.mxu0 0.0
      %880 = vmatpush.msra.mxu0 0.0
      %881 = vmatpush.msra.mxu0 0.0
      %882 = vmatpush.msra.mxu0 0.0
      %883 = vmatpush.msra.mxu0 0.0
      %884 = vmatpush.msra.mxu0 0.0
      %885 = vmatpush.msra.mxu0 0.0
      %886 = vmatpush.msra.mxu0 0.0
      %887 = vmatpush.msra.mxu0 0.0
      %888 = vmatpush.msra.mxu0 0.0
      %889 = vmatpush.msra.mxu0 0.0
      %890 = vmatpush.msra.mxu0 0.0
      %891 = vmatpush.msra.mxu0 0.0
      %v892 = vand.u32 %v205, 4294901760
      %893 = vmatpush.msra.mxu0 %v892
      %v894 = vand.u32 %v172, 4294901760
      %895 = vmatpush.msra.mxu0 %v894
      %v896 = vand.u32 %v190, 4294901760
      %v897 = vsub.f32 %v190, %v896
      %v898 = vand.u32 %v897, 4294901760
      %899 = vmatmul.f32.gmra.mxu0 %v898
      %v900 = vpop.f32.mrf.mxu0
      %v901 = vadd.f32 %v871, %v900
      %v902 = vand.u32 %v192, 4294901760
      %v903 = vsub.f32 %v192, %v902
      %v904 = vand.u32 %v903, 4294901760
      %905 = vmatmul.f32.gmra.mxu0 %v904
      %v906 = vpop.f32.mrf.mxu0
      %v907 = vadd.f32 %v876, %v906
      %908 = vdwg.mxu0
      %909 = vmatpush.msra.mxu0 0.0
      %910 = vmatpush.msra.mxu0 0.0
      %911 = vmatpush.msra.mxu0 0.0
      %912 = vmatpush.msra.mxu0 0.0
      %913 = vmatpush.msra.mxu0 0.0
      %914 = vmatpush.msra.mxu0 0.0
      %915 = vmatpush.msra.mxu0 0.0
      %916 = vmatpush.msra.mxu0 0.0
      %917 = vmatpush.msra.mxu0 0.0
      %918 = vmatpush.msra.mxu0 0.0
      %919 = vmatpush.msra.mxu0 0.0
      %920 = vmatpush.msra.mxu0 0.0
      %921 = vmatpush.msra.mxu0 0.0
      %922 = vmatpush.msra.mxu0 0.0
      %v923 = vand.u32 %v205, 4294901760
      %v924 = vsub.f32 %v205, %v923
      %v925 = vand.u32 %v924, 4294901760
      %926 = vmatpush.msra.mxu0 %v925
      %v927 = vand.u32 %v172, 4294901760
      %v928 = vsub.f32 %v172, %v927
      %v929 = vand.u32 %v928, 4294901760
      %930 = vmatpush.msra.mxu0 %v929
      %v931 = vand.u32 %v190, 4294901760
      %932 = vmatmul.f32.gmra.mxu0 %v931
      %v933 = vpop.f32.mrf.mxu0
      %v934 = vadd.f32 %v901, %v933
      %v935 = vand.u32 %v192, 4294901760
      %936 = vmatmul.f32.gmra.mxu0 %v935
      %v937 = vpop.f32.mrf.mxu0
      %v938 = vadd.f32 %v907, %v937
      %939 = vdwg.mxu0
      %940 = vmatpush.msra.mxu0 0.0
      %941 = vmatpush.msra.mxu0 0.0
      %942 = vmatpush.msra.mxu0 0.0
      %943 = vmatpush.msra.mxu0 0.0
      %944 = vmatpush.msra.mxu0 0.0
      %945 = vmatpush.msra.mxu0 0.0
      %946 = vmatpush.msra.mxu0 0.0
      %947 = vmatpush.msra.mxu0 0.0
      %948 = vmatpush.msra.mxu0 0.0
      %949 = vmatpush.msra.mxu0 0.0
      %950 = vmatpush.msra.mxu0 0.0
      %951 = vmatpush.msra.mxu0 0.0
      %952 = vmatpush.msra.mxu0 0.0
      %953 = vmatpush.msra.mxu0 0.0
      %v954 = vand.u32 %v205, 4294901760
      %955 = vmatpush.msra.mxu0 %v954
      %v956 = vand.u32 %v172, 4294901760
      %957 = vmatpush.msra.mxu0 %v956
      %v958 = vand.u32 %v190, 4294901760
      %959 = vmatmul.f32.gmra.mxu0 %v958
      %v960 = vpop.f32.mrf.mxu0
      %v961 = vadd.f32 %v934, %v960
      %v962 = vand.u32 %v192, 4294901760
      %963 = vmatmul.f32.gmra.mxu0 %v962
      %v964 = vpop.f32.mrf.mxu0
      %v965 = vadd.f32 %v938, %v964
      %966 = vdwg.mxu0
      %v967 = vmax.f32 %v391, 0.0
      %v968 = vmax.f32 %v581, 0.0
      %v969 = vmax.f32 %v771, 0.0
      %v970 = vmax.f32 %v961, 0.0
      %v971 = vmax.f32 %v395, 0.0
      %v972 = vmax.f32 %v585, 0.0
      %v973 = vmax.f32 %v775, 0.0
      %v974 = vmax.f32 %v965, 0.0
      %v975 = vld [vmem:[%s2] sm:$0xf]
      %977 = vset.pattern.permute.xlu0 16
      %978 = vperm.xlu0 %977, %v975
      %v979 = vpop.permute.xlu0 %978
      %vm981 = vcmask 130048
      %v982 = vsel %vm981, %v975, 0
      %984 = vmatpush.msra.mxu0 0.0
      %985 = vmatpush.msra.mxu0 0.0
      %986 = vmatpush.msra.mxu0 0.0
      %987 = vmatpush.msra.mxu0 0.0
      %988 = vmatpush.msra.mxu0 0.0
      %989 = vmatpush.msra.mxu0 0.0
      %990 = vmatpush.msra.mxu0 0.0
      %991 = vmatpush.msra.mxu0 0.0
      %992 = vmatpush.msra.mxu0 0.0
      %993 = vmatpush.msra.mxu0 0.0
      %994 = vmatpush.msra.mxu0 0.0
      %995 = vmatpush.msra.mxu0 0.0
      %996 = vmatpush.msra.mxu0 0.0
      %997 = vmatpush.msra.mxu0 0.0
      %v998 = vand.u32 %v971, 4294901760
      %999 = vmatpush.msra.mxu0 %v998
      %v1000 = vand.u32 %v967, 4294901760
      %1001 = vmatpush.msra.mxu0 %v1000
      %v1002 = vand.u32 %v982, 4294901760
      %v1003 = vsub.f32 %v982, %v1002
      %v1004 = vand.u32 %v1003, 4294901760
      %v1005 = vsub.f32 %v1003, %v1004
      %v1006 = vand.u32 %v1005, 4294901760
      %1007 = vmatmul.f32.gmra.mxu0 %v1006
      %v1008 = vpop.f32.mrf.mxu0
      %v1009 = vadd.f32 %v979, %v1008
      %1010 = vdwg.mxu0
      %1011 = vmatpush.msra.mxu0 0.0
      %1012 = vmatpush.msra.mxu0 0.0
      %1013 = vmatpush.msra.mxu0 0.0
      %1014 = vmatpush.msra.mxu0 0.0
      %1015 = vmatpush.msra.mxu0 0.0
      %1016 = vmatpush.msra.mxu0 0.0
      %1017 = vmatpush.msra.mxu0 0.0
      %1018 = vmatpush.msra.mxu0 0.0
      %1019 = vmatpush.msra.mxu0 0.0
      %1020 = vmatpush.msra.mxu0 0.0
      %1021 = vmatpush.msra.mxu0 0.0
      %1022 = vmatpush.msra.mxu0 0.0
      %1023 = vmatpush.msra.mxu0 0.0
      %1024 = vmatpush.msra.mxu0 0.0
      %v1025 = vand.u32 %v971, 4294901760
      %v1026 = vsub.f32 %v971, %v1025
      %v1027 = vand.u32 %v1026, 4294901760
      %v1028 = vsub.f32 %v1026, %v1027
      %v1029 = vand.u32 %v1028, 4294901760
      %1030 = vmatpush.msra.mxu0 %v1029
      %v1031 = vand.u32 %v967, 4294901760
      %v1032 = vsub.f32 %v967, %v1031
      %v1033 = vand.u32 %v1032, 4294901760
      %v1034 = vsub.f32 %v1032, %v1033
      %v1035 = vand.u32 %v1034, 4294901760
      %1036 = vmatpush.msra.mxu0 %v1035
      %v1037 = vand.u32 %v982, 4294901760
      %1038 = vmatmul.f32.gmra.mxu0 %v1037
      %v1039 = vpop.f32.mrf.mxu0
      %v1040 = vadd.f32 %v1009, %v1039
      %1041 = vdwg.mxu0
      %1042 = vmatpush.msra.mxu0 0.0
      %1043 = vmatpush.msra.mxu0 0.0
      %1044 = vmatpush.msra.mxu0 0.0
      %1045 = vmatpush.msra.mxu0 0.0
      %1046 = vmatpush.msra.mxu0 0.0
      %1047 = vmatpush.msra.mxu0 0.0
      %1048 = vmatpush.msra.mxu0 0.0
      %1049 = vmatpush.msra.mxu0 0.0
      %1050 = vmatpush.msra.mxu0 0.0
      %1051 = vmatpush.msra.mxu0 0.0
      %1052 = vmatpush.msra.mxu0 0.0
      %1053 = vmatpush.msra.mxu0 0.0
      %1054 = vmatpush.msra.mxu0 0.0
      %1055 = vmatpush.msra.mxu0 0.0
      %v1056 = vand.u32 %v971, 4294901760
      %v1057 = vsub.f32 %v971, %v1056
      %1058 = vmatpush.msra.mxu0 %v1057
      %v1059 = vand.u32 %v967, 4294901760
      %v1060 = vsub.f32 %v967, %v1059
      %1061 = vmatpush.msra.mxu0 %v1060
      %v1062 = vand.u32 %v982, 4294901760
      %v1063 = vsub.f32 %v982, %v1062
      %1064 = vmatmul.f32.gmra.mxu0 %v1063
      %v1065 = vpop.f32.mrf.mxu0
      %v1066 = vadd.f32 %v1040, %v1065
      %1067 = vdwg.mxu0
      %1068 = vmatpush.msra.mxu0 0.0
      %1069 = vmatpush.msra.mxu0 0.0
      %1070 = vmatpush.msra.mxu0 0.0
      %1071 = vmatpush.msra.mxu0 0.0
      %1072 = vmatpush.msra.mxu0 0.0
      %1073 = vmatpush.msra.mxu0 0.0
      %1074 = vmatpush.msra.mxu0 0.0
      %1075 = vmatpush.msra.mxu0 0.0
      %1076 = vmatpush.msra.mxu0 0.0
      %1077 = vmatpush.msra.mxu0 0.0
      %1078 = vmatpush.msra.mxu0 0.0
      %1079 = vmatpush.msra.mxu0 0.0
      %1080 = vmatpush.msra.mxu0 0.0
      %1081 = vmatpush.msra.mxu0 0.0
      %v1082 = vand.u32 %v971, 4294901760
      %1083 = vmatpush.msra.mxu0 %v1082
      %v1084 = vand.u32 %v967, 4294901760
      %1085 = vmatpush.msra.mxu0 %v1084
      %v1086 = vand.u32 %v982, 4294901760
      %v1087 = vsub.f32 %v982, %v1086
      %v1088 = vand.u32 %v1087, 4294901760
      %1089 = vmatmul.f32.gmra.mxu0 %v1088
      %v1090 = vpop.f32.mrf.mxu0
      %v1091 = vadd.f32 %v1066, %v1090
      %1092 = vdwg.mxu0
      %1093 = vmatpush.msra.mxu0 0.0
      %1094 = vmatpush.msra.mxu0 0.0
      %1095 = vmatpush.msra.mxu0 0.0
      %1096 = vmatpush.msra.mxu0 0.0
      %1097 = vmatpush.msra.mxu0 0.0
      %1098 = vmatpush.msra.mxu0 0.0
      %1099 = vmatpush.msra.mxu0 0.0
      %1100 = vmatpush.msra.mxu0 0.0
      %1101 = vmatpush.msra.mxu0 0.0
      %1102 = vmatpush.msra.mxu0 0.0
      %1103 = vmatpush.msra.mxu0 0.0
      %1104 = vmatpush.msra.mxu0 0.0
      %1105 = vmatpush.msra.mxu0 0.0
      %1106 = vmatpush.msra.mxu0 0.0
      %v1107 = vand.u32 %v971, 4294901760
      %v1108 = vsub.f32 %v971, %v1107
      %v1109 = vand.u32 %v1108, 4294901760
      %1110 = vmatpush.msra.mxu0 %v1109
      %v1111 = vand.u32 %v967, 4294901760
      %v1112 = vsub.f32 %v967, %v1111
      %v1113 = vand.u32 %v1112, 4294901760
      %1114 = vmatpush.msra.mxu0 %v1113
      %v1115 = vand.u32 %v982, 4294901760
      %1116 = vmatmul.f32.gmra.mxu0 %v1115
      %v1117 = vpop.f32.mrf.mxu0
      %v1118 = vadd.f32 %v1091, %v1117
      %1119 = vdwg.mxu0
      %1120 = vmatpush.msra.mxu0 0.0
      %1121 = vmatpush.msra.mxu0 0.0
      %1122 = vmatpush.msra.mxu0 0.0
      %1123 = vmatpush.msra.mxu0 0.0
      %1124 = vmatpush.msra.mxu0 0.0
      %1125 = vmatpush.msra.mxu0 0.0
      %1126 = vmatpush.msra.mxu0 0.0
      %1127 = vmatpush.msra.mxu0 0.0
      %1128 = vmatpush.msra.mxu0 0.0
      %1129 = vmatpush.msra.mxu0 0.0
      %1130 = vmatpush.msra.mxu0 0.0
      %1131 = vmatpush.msra.mxu0 0.0
      %1132 = vmatpush.msra.mxu0 0.0
      %1133 = vmatpush.msra.mxu0 0.0
      %v1134 = vand.u32 %v971, 4294901760
      %1135 = vmatpush.msra.mxu0 %v1134
      %v1136 = vand.u32 %v967, 4294901760
      %1137 = vmatpush.msra.mxu0 %v1136
      %v1138 = vand.u32 %v982, 4294901760
      %1139 = vmatmul.f32.gmra.mxu0 %v1138
      %v1140 = vpop.f32.mrf.mxu0
      %v1141 = vadd.f32 %v1118, %v1140
      %1142 = vdwg.mxu0
      %1143 = vmatpush.msra.mxu0 0.0
      %1144 = vmatpush.msra.mxu0 0.0
      %1145 = vmatpush.msra.mxu0 0.0
      %1146 = vmatpush.msra.mxu0 0.0
      %1147 = vmatpush.msra.mxu0 0.0
      %1148 = vmatpush.msra.mxu0 0.0
      %1149 = vmatpush.msra.mxu0 0.0
      %1150 = vmatpush.msra.mxu0 0.0
      %1151 = vmatpush.msra.mxu0 0.0
      %1152 = vmatpush.msra.mxu0 0.0
      %1153 = vmatpush.msra.mxu0 0.0
      %1154 = vmatpush.msra.mxu0 0.0
      %1155 = vmatpush.msra.mxu0 0.0
      %1156 = vmatpush.msra.mxu0 0.0
      %v1157 = vand.u32 %v972, 4294901760
      %1158 = vmatpush.msra.mxu0 %v1157
      %v1159 = vand.u32 %v968, 4294901760
      %1160 = vmatpush.msra.mxu0 %v1159
      %v1161 = vand.u32 %v982, 4294901760
      %v1162 = vsub.f32 %v982, %v1161
      %v1163 = vand.u32 %v1162, 4294901760
      %v1164 = vsub.f32 %v1162, %v1163
      %v1165 = vand.u32 %v1164, 4294901760
      %1166 = vmatmul.f32.gmra.mxu0 %v1165
      %v1167 = vpop.f32.mrf.mxu0
      %v1168 = vadd.f32 %v979, %v1167
      %1169 = vdwg.mxu0
      %1170 = vmatpush.msra.mxu0 0.0
      %1171 = vmatpush.msra.mxu0 0.0
      %1172 = vmatpush.msra.mxu0 0.0
      %1173 = vmatpush.msra.mxu0 0.0
      %1174 = vmatpush.msra.mxu0 0.0
      %1175 = vmatpush.msra.mxu0 0.0
      %1176 = vmatpush.msra.mxu0 0.0
      %1177 = vmatpush.msra.mxu0 0.0
      %1178 = vmatpush.msra.mxu0 0.0
      %1179 = vmatpush.msra.mxu0 0.0
      %1180 = vmatpush.msra.mxu0 0.0
      %1181 = vmatpush.msra.mxu0 0.0
      %1182 = vmatpush.msra.mxu0 0.0
      %1183 = vmatpush.msra.mxu0 0.0
      %v1184 = vand.u32 %v972, 4294901760
      %v1185 = vsub.f32 %v972, %v1184
      %v1186 = vand.u32 %v1185, 4294901760
      %v1187 = vsub.f32 %v1185, %v1186
      %v1188 = vand.u32 %v1187, 4294901760
      %1189 = vmatpush.msra.mxu0 %v1188
      %v1190 = vand.u32 %v968, 4294901760
      %v1191 = vsub.f32 %v968, %v1190
      %v1192 = vand.u32 %v1191, 4294901760
      %v1193 = vsub.f32 %v1191, %v1192
      %v1194 = vand.u32 %v1193, 4294901760
      %1195 = vmatpush.msra.mxu0 %v1194
      %v1196 = vand.u32 %v982, 4294901760
      %1197 = vmatmul.f32.gmra.mxu0 %v1196
      %v1198 = vpop.f32.mrf.mxu0
      %v1199 = vadd.f32 %v1168, %v1198
      %1200 = vdwg.mxu0
      %1201 = vmatpush.msra.mxu0 0.0
      %1202 = vmatpush.msra.mxu0 0.0
      %1203 = vmatpush.msra.mxu0 0.0
      %1204 = vmatpush.msra.mxu0 0.0
      %1205 = vmatpush.msra.mxu0 0.0
      %1206 = vmatpush.msra.mxu0 0.0
      %1207 = vmatpush.msra.mxu0 0.0
      %1208 = vmatpush.msra.mxu0 0.0
      %1209 = vmatpush.msra.mxu0 0.0
      %1210 = vmatpush.msra.mxu0 0.0
      %1211 = vmatpush.msra.mxu0 0.0
      %1212 = vmatpush.msra.mxu0 0.0
      %1213 = vmatpush.msra.mxu0 0.0
      %1214 = vmatpush.msra.mxu0 0.0
      %v1215 = vand.u32 %v972, 4294901760
      %v1216 = vsub.f32 %v972, %v1215
      %1217 = vmatpush.msra.mxu0 %v1216
      %v1218 = vand.u32 %v968, 4294901760
      %v1219 = vsub.f32 %v968, %v1218
      %1220 = vmatpush.msra.mxu0 %v1219
      %v1221 = vand.u32 %v982, 4294901760
      %v1222 = vsub.f32 %v982, %v1221
      %1223 = vmatmul.f32.gmra.mxu0 %v1222
      %v1224 = vpop.f32.mrf.mxu0
      %v1225 = vadd.f32 %v1199, %v1224
      %1226 = vdwg.mxu0
      %1227 = vmatpush.msra.mxu0 0.0
      %1228 = vmatpush.msra.mxu0 0.0
      %1229 = vmatpush.msra.mxu0 0.0
      %1230 = vmatpush.msra.mxu0 0.0
      %1231 = vmatpush.msra.mxu0 0.0
      %1232 = vmatpush.msra.mxu0 0.0
      %1233 = vmatpush.msra.mxu0 0.0
      %1234 = vmatpush.msra.mxu0 0.0
      %1235 = vmatpush.msra.mxu0 0.0
      %1236 = vmatpush.msra.mxu0 0.0
      %1237 = vmatpush.msra.mxu0 0.0
      %1238 = vmatpush.msra.mxu0 0.0
      %1239 = vmatpush.msra.mxu0 0.0
      %1240 = vmatpush.msra.mxu0 0.0
      %v1241 = vand.u32 %v972, 4294901760
      %1242 = vmatpush.msra.mxu0 %v1241
      %v1243 = vand.u32 %v968, 4294901760
      %1244 = vmatpush.msra.mxu0 %v1243
      %v1245 = vand.u32 %v982, 4294901760
      %v1246 = vsub.f32 %v982, %v1245
      %v1247 = vand.u32 %v1246, 4294901760
      %1248 = vmatmul.f32.gmra.mxu0 %v1247
      %v1249 = vpop.f32.mrf.mxu0
      %v1250 = vadd.f32 %v1225, %v1249
      %1251 = vdwg.mxu0
      %1252 = vmatpush.msra.mxu0 0.0
      %1253 = vmatpush.msra.mxu0 0.0
      %1254 = vmatpush.msra.mxu0 0.0
      %1255 = vmatpush.msra.mxu0 0.0
      %1256 = vmatpush.msra.mxu0 0.0
      %1257 = vmatpush.msra.mxu0 0.0
      %1258 = vmatpush.msra.mxu0 0.0
      %1259 = vmatpush.msra.mxu0 0.0
      %1260 = vmatpush.msra.mxu0 0.0
      %1261 = vmatpush.msra.mxu0 0.0
      %1262 = vmatpush.msra.mxu0 0.0
      %1263 = vmatpush.msra.mxu0 0.0
      %1264 = vmatpush.msra.mxu0 0.0
      %1265 = vmatpush.msra.mxu0 0.0
      %v1266 = vand.u32 %v972, 4294901760
      %v1267 = vsub.f32 %v972, %v1266
      %v1268 = vand.u32 %v1267, 4294901760
      %1269 = vmatpush.msra.mxu0 %v1268
      %v1270 = vand.u32 %v968, 4294901760
      %v1271 = vsub.f32 %v968, %v1270
      %v1272 = vand.u32 %v1271, 4294901760
      %1273 = vmatpush.msra.mxu0 %v1272
      %v1274 = vand.u32 %v982, 4294901760
      %1275 = vmatmul.f32.gmra.mxu0 %v1274
      %v1276 = vpop.f32.mrf.mxu0
      %v1277 = vadd.f32 %v1250, %v1276
      %1278 = vdwg.mxu0
      %1279 = vmatpush.msra.mxu0 0.0
      %1280 = vmatpush.msra.mxu0 0.0
      %1281 = vmatpush.msra.mxu0 0.0
      %1282 = vmatpush.msra.mxu0 0.0
      %1283 = vmatpush.msra.mxu0 0.0
      %1284 = vmatpush.msra.mxu0 0.0
      %1285 = vmatpush.msra.mxu0 0.0
      %1286 = vmatpush.msra.mxu0 0.0
      %1287 = vmatpush.msra.mxu0 0.0
      %1288 = vmatpush.msra.mxu0 0.0
      %1289 = vmatpush.msra.mxu0 0.0
      %1290 = vmatpush.msra.mxu0 0.0
      %1291 = vmatpush.msra.mxu0 0.0
      %1292 = vmatpush.msra.mxu0 0.0
      %v1293 = vand.u32 %v972, 4294901760
      %1294 = vmatpush.msra.mxu0 %v1293
      %v1295 = vand.u32 %v968, 4294901760
      %1296 = vmatpush.msra.mxu0 %v1295
      %v1297 = vand.u32 %v982, 4294901760
      %1298 = vmatmul.f32.gmra.mxu0 %v1297
      %v1299 = vpop.f32.mrf.mxu0
      %v1300 = vadd.f32 %v1277, %v1299
      %1301 = vdwg.mxu0
      %1302 = vmatpush.msra.mxu0 0.0
      %1303 = vmatpush.msra.mxu0 0.0
      %1304 = vmatpush.msra.mxu0 0.0
      %1305 = vmatpush.msra.mxu0 0.0
      %1306 = vmatpush.msra.mxu0 0.0
      %1307 = vmatpush.msra.mxu0 0.0
      %1308 = vmatpush.msra.mxu0 0.0
      %1309 = vmatpush.msra.mxu0 0.0
      %1310 = vmatpush.msra.mxu0 0.0
      %1311 = vmatpush.msra.mxu0 0.0
      %1312 = vmatpush.msra.mxu0 0.0
      %1313 = vmatpush.msra.mxu0 0.0
      %1314 = vmatpush.msra.mxu0 0.0
      %1315 = vmatpush.msra.mxu0 0.0
      %v1316 = vand.u32 %v973, 4294901760
      %1317 = vmatpush.msra.mxu0 %v1316
      %v1318 = vand.u32 %v969, 4294901760
      %1319 = vmatpush.msra.mxu0 %v1318
      %v1320 = vand.u32 %v982, 4294901760
      %v1321 = vsub.f32 %v982, %v1320
      %v1322 = vand.u32 %v1321, 4294901760
      %v1323 = vsub.f32 %v1321, %v1322
      %v1324 = vand.u32 %v1323, 4294901760
      %1325 = vmatmul.f32.gmra.mxu0 %v1324
      %v1326 = vpop.f32.mrf.mxu0
      %v1327 = vadd.f32 %v979, %v1326
      %1328 = vdwg.mxu0
      %1329 = vmatpush.msra.mxu0 0.0
      %1330 = vmatpush.msra.mxu0 0.0
      %1331 = vmatpush.msra.mxu0 0.0
      %1332 = vmatpush.msra.mxu0 0.0
      %1333 = vmatpush.msra.mxu0 0.0
      %1334 = vmatpush.msra.mxu0 0.0
      %1335 = vmatpush.msra.mxu0 0.0
      %1336 = vmatpush.msra.mxu0 0.0
      %1337 = vmatpush.msra.mxu0 0.0
      %1338 = vmatpush.msra.mxu0 0.0
      %1339 = vmatpush.msra.mxu0 0.0
      %1340 = vmatpush.msra.mxu0 0.0
      %1341 = vmatpush.msra.mxu0 0.0
      %1342 = vmatpush.msra.mxu0 0.0
      %v1343 = vand.u32 %v973, 4294901760
      %v1344 = vsub.f32 %v973, %v1343
      %v1345 = vand.u32 %v1344, 4294901760
      %v1346 = vsub.f32 %v1344, %v1345
      %v1347 = vand.u32 %v1346, 4294901760
      %1348 = vmatpush.msra.mxu0 %v1347
      %v1349 = vand.u32 %v969, 4294901760
      %v1350 = vsub.f32 %v969, %v1349
      %v1351 = vand.u32 %v1350, 4294901760
      %v1352 = vsub.f32 %v1350, %v1351
      %v1353 = vand.u32 %v1352, 4294901760
      %1354 = vmatpush.msra.mxu0 %v1353
      %v1355 = vand.u32 %v982, 4294901760
      %1356 = vmatmul.f32.gmra.mxu0 %v1355
      %v1357 = vpop.f32.mrf.mxu0
      %v1358 = vadd.f32 %v1327, %v1357
      %1359 = vdwg.mxu0
      %1360 = vmatpush.msra.mxu0 0.0
      %1361 = vmatpush.msra.mxu0 0.0
      %1362 = vmatpush.msra.mxu0 0.0
      %1363 = vmatpush.msra.mxu0 0.0
      %1364 = vmatpush.msra.mxu0 0.0
      %1365 = vmatpush.msra.mxu0 0.0
      %1366 = vmatpush.msra.mxu0 0.0
      %1367 = vmatpush.msra.mxu0 0.0
      %1368 = vmatpush.msra.mxu0 0.0
      %1369 = vmatpush.msra.mxu0 0.0
      %1370 = vmatpush.msra.mxu0 0.0
      %1371 = vmatpush.msra.mxu0 0.0
      %1372 = vmatpush.msra.mxu0 0.0
      %1373 = vmatpush.msra.mxu0 0.0
      %v1374 = vand.u32 %v973, 4294901760
      %v1375 = vsub.f32 %v973, %v1374
      %1376 = vmatpush.msra.mxu0 %v1375
      %v1377 = vand.u32 %v969, 4294901760
      %v1378 = vsub.f32 %v969, %v1377
      %1379 = vmatpush.msra.mxu0 %v1378
      %v1380 = vand.u32 %v982, 4294901760
      %v1381 = vsub.f32 %v982, %v1380
      %1382 = vmatmul.f32.gmra.mxu0 %v1381
      %v1383 = vpop.f32.mrf.mxu0
      %v1384 = vadd.f32 %v1358, %v1383
      %1385 = vdwg.mxu0
      %1386 = vmatpush.msra.mxu0 0.0
      %1387 = vmatpush.msra.mxu0 0.0
      %1388 = vmatpush.msra.mxu0 0.0
      %1389 = vmatpush.msra.mxu0 0.0
      %1390 = vmatpush.msra.mxu0 0.0
      %1391 = vmatpush.msra.mxu0 0.0
      %1392 = vmatpush.msra.mxu0 0.0
      %1393 = vmatpush.msra.mxu0 0.0
      %1394 = vmatpush.msra.mxu0 0.0
      %1395 = vmatpush.msra.mxu0 0.0
      %1396 = vmatpush.msra.mxu0 0.0
      %1397 = vmatpush.msra.mxu0 0.0
      %1398 = vmatpush.msra.mxu0 0.0
      %1399 = vmatpush.msra.mxu0 0.0
      %v1400 = vand.u32 %v973, 4294901760
      %1401 = vmatpush.msra.mxu0 %v1400
      %v1402 = vand.u32 %v969, 4294901760
      %1403 = vmatpush.msra.mxu0 %v1402
      %v1404 = vand.u32 %v982, 4294901760
      %v1405 = vsub.f32 %v982, %v1404
      %v1406 = vand.u32 %v1405, 4294901760
      %1407 = vmatmul.f32.gmra.mxu0 %v1406
      %v1408 = vpop.f32.mrf.mxu0
      %v1409 = vadd.f32 %v1384, %v1408
      %1410 = vdwg.mxu0
      %1411 = vmatpush.msra.mxu0 0.0
      %1412 = vmatpush.msra.mxu0 0.0
      %1413 = vmatpush.msra.mxu0 0.0
      %1414 = vmatpush.msra.mxu0 0.0
      %1415 = vmatpush.msra.mxu0 0.0
      %1416 = vmatpush.msra.mxu0 0.0
      %1417 = vmatpush.msra.mxu0 0.0
      %1418 = vmatpush.msra.mxu0 0.0
      %1419 = vmatpush.msra.mxu0 0.0
      %1420 = vmatpush.msra.mxu0 0.0
      %1421 = vmatpush.msra.mxu0 0.0
      %1422 = vmatpush.msra.mxu0 0.0
      %1423 = vmatpush.msra.mxu0 0.0
      %1424 = vmatpush.msra.mxu0 0.0
      %v1425 = vand.u32 %v973, 4294901760
      %v1426 = vsub.f32 %v973, %v1425
      %v1427 = vand.u32 %v1426, 4294901760
      %1428 = vmatpush.msra.mxu0 %v1427
      %v1429 = vand.u32 %v969, 4294901760
      %v1430 = vsub.f32 %v969, %v1429
      %v1431 = vand.u32 %v1430, 4294901760
      %1432 = vmatpush.msra.mxu0 %v1431
      %v1433 = vand.u32 %v982, 4294901760
      %1434 = vmatmul.f32.gmra.mxu0 %v1433
      %v1435 = vpop.f32.mrf.mxu0
      %v1436 = vadd.f32 %v1409, %v1435
      %1437 = vdwg.mxu0
      %1438 = vmatpush.msra.mxu0 0.0
      %1439 = vmatpush.msra.mxu0 0.0
      %1440 = vmatpush.msra.mxu0 0.0
      %1441 = vmatpush.msra.mxu0 0.0
      %1442 = vmatpush.msra.mxu0 0.0
      %1443 = vmatpush.msra.mxu0 0.0
      %1444 = vmatpush.msra.mxu0 0.0
      %1445 = vmatpush.msra.mxu0 0.0
      %1446 = vmatpush.msra.mxu0 0.0
      %1447 = vmatpush.msra.mxu0 0.0
      %1448 = vmatpush.msra.mxu0 0.0
      %1449 = vmatpush.msra.mxu0 0.0
      %1450 = vmatpush.msra.mxu0 0.0
      %1451 = vmatpush.msra.mxu0 0.0
      %v1452 = vand.u32 %v973, 4294901760
      %1453 = vmatpush.msra.mxu0 %v1452
      %v1454 = vand.u32 %v969, 4294901760
      %1455 = vmatpush.msra.mxu0 %v1454
      %v1456 = vand.u32 %v982, 4294901760
      %1457 = vmatmul.f32.gmra.mxu0 %v1456
      %v1458 = vpop.f32.mrf.mxu0
      %v1459 = vadd.f32 %v1436, %v1458
      %1460 = vdwg.mxu0
      %1461 = vmatpush.msra.mxu0 0.0
      %1462 = vmatpush.msra.mxu0 0.0
      %1463 = vmatpush.msra.mxu0 0.0
      %1464 = vmatpush.msra.mxu0 0.0
      %1465 = vmatpush.msra.mxu0 0.0
      %1466 = vmatpush.msra.mxu0 0.0
      %1467 = vmatpush.msra.mxu0 0.0
      %1468 = vmatpush.msra.mxu0 0.0
      %1469 = vmatpush.msra.mxu0 0.0
      %1470 = vmatpush.msra.mxu0 0.0
      %1471 = vmatpush.msra.mxu0 0.0
      %1472 = vmatpush.msra.mxu0 0.0
      %1473 = vmatpush.msra.mxu0 0.0
      %1474 = vmatpush.msra.mxu0 0.0
      %v1475 = vand.u32 %v974, 4294901760
      %1476 = vmatpush.msra.mxu0 %v1475
      %v1477 = vand.u32 %v970, 4294901760
      %1478 = vmatpush.msra.mxu0 %v1477
      %v1479 = vand.u32 %v982, 4294901760
      %v1480 = vsub.f32 %v982, %v1479
      %v1481 = vand.u32 %v1480, 4294901760
      %v1482 = vsub.f32 %v1480, %v1481
      %v1483 = vand.u32 %v1482, 4294901760
      %1484 = vmatmul.f32.gmra.mxu0 %v1483
      %v1485 = vpop.f32.mrf.mxu0
      %v1486 = vadd.f32 %v979, %v1485
      %1487 = vdwg.mxu0
      %1488 = vmatpush.msra.mxu0 0.0
      %1489 = vmatpush.msra.mxu0 0.0
      %1490 = vmatpush.msra.mxu0 0.0
      %1491 = vmatpush.msra.mxu0 0.0
      %1492 = vmatpush.msra.mxu0 0.0
      %1493 = vmatpush.msra.mxu0 0.0
      %1494 = vmatpush.msra.mxu0 0.0
      %1495 = vmatpush.msra.mxu0 0.0
      %1496 = vmatpush.msra.mxu0 0.0
      %1497 = vmatpush.msra.mxu0 0.0
      %1498 = vmatpush.msra.mxu0 0.0
      %1499 = vmatpush.msra.mxu0 0.0
      %1500 = vmatpush.msra.mxu0 0.0
      %1501 = vmatpush.msra.mxu0 0.0
      %v1502 = vand.u32 %v974, 4294901760
      %v1503 = vsub.f32 %v974, %v1502
      %v1504 = vand.u32 %v1503, 4294901760
      %v1505 = vsub.f32 %v1503, %v1504
      %v1506 = vand.u32 %v1505, 4294901760
      %1507 = vmatpush.msra.mxu0 %v1506
      %v1508 = vand.u32 %v970, 4294901760
      %v1509 = vsub.f32 %v970, %v1508
      %v1510 = vand.u32 %v1509, 4294901760
      %v1511 = vsub.f32 %v1509, %v1510
      %v1512 = vand.u32 %v1511, 4294901760
      %1513 = vmatpush.msra.mxu0 %v1512
      %v1514 = vand.u32 %v982, 4294901760
      %1515 = vmatmul.f32.gmra.mxu0 %v1514
      %v1516 = vpop.f32.mrf.mxu0
      %v1517 = vadd.f32 %v1486, %v1516
      %1518 = vdwg.mxu0
      %1519 = vmatpush.msra.mxu0 0.0
      %1520 = vmatpush.msra.mxu0 0.0
      %1521 = vmatpush.msra.mxu0 0.0
      %1522 = vmatpush.msra.mxu0 0.0
      %1523 = vmatpush.msra.mxu0 0.0
      %1524 = vmatpush.msra.mxu0 0.0
      %1525 = vmatpush.msra.mxu0 0.0
      %1526 = vmatpush.msra.mxu0 0.0
      %1527 = vmatpush.msra.mxu0 0.0
      %1528 = vmatpush.msra.mxu0 0.0
      %1529 = vmatpush.msra.mxu0 0.0
      %1530 = vmatpush.msra.mxu0 0.0
      %1531 = vmatpush.msra.mxu0 0.0
      %1532 = vmatpush.msra.mxu0 0.0
      %v1533 = vand.u32 %v974, 4294901760
      %v1534 = vsub.f32 %v974, %v1533
      %1535 = vmatpush.msra.mxu0 %v1534
      %v1536 = vand.u32 %v970, 4294901760
      %v1537 = vsub.f32 %v970, %v1536
      %1538 = vmatpush.msra.mxu0 %v1537
      %v1539 = vand.u32 %v982, 4294901760
      %v1540 = vsub.f32 %v982, %v1539
      %1541 = vmatmul.f32.gmra.mxu0 %v1540
      %v1542 = vpop.f32.mrf.mxu0
      %v1543 = vadd.f32 %v1517, %v1542
      %1544 = vdwg.mxu0
      %1545 = vmatpush.msra.mxu0 0.0
      %1546 = vmatpush.msra.mxu0 0.0
      %1547 = vmatpush.msra.mxu0 0.0
      %1548 = vmatpush.msra.mxu0 0.0
      %1549 = vmatpush.msra.mxu0 0.0
      %1550 = vmatpush.msra.mxu0 0.0
      %1551 = vmatpush.msra.mxu0 0.0
      %1552 = vmatpush.msra.mxu0 0.0
      %1553 = vmatpush.msra.mxu0 0.0
      %1554 = vmatpush.msra.mxu0 0.0
      %1555 = vmatpush.msra.mxu0 0.0
      %1556 = vmatpush.msra.mxu0 0.0
      %1557 = vmatpush.msra.mxu0 0.0
      %1558 = vmatpush.msra.mxu0 0.0
      %v1559 = vand.u32 %v974, 4294901760
      %1560 = vmatpush.msra.mxu0 %v1559
      %v1561 = vand.u32 %v970, 4294901760
      %1562 = vmatpush.msra.mxu0 %v1561
      %v1563 = vand.u32 %v982, 4294901760
      %v1564 = vsub.f32 %v982, %v1563
      %v1565 = vand.u32 %v1564, 4294901760
      %1566 = vmatmul.f32.gmra.mxu0 %v1565
      %v1567 = vpop.f32.mrf.mxu0
      %v1568 = vadd.f32 %v1543, %v1567
      %1569 = vdwg.mxu0
      %1570 = vmatpush.msra.mxu0 0.0
      %1571 = vmatpush.msra.mxu0 0.0
      %1572 = vmatpush.msra.mxu0 0.0
      %1573 = vmatpush.msra.mxu0 0.0
      %1574 = vmatpush.msra.mxu0 0.0
      %1575 = vmatpush.msra.mxu0 0.0
      %1576 = vmatpush.msra.mxu0 0.0
      %1577 = vmatpush.msra.mxu0 0.0
      %1578 = vmatpush.msra.mxu0 0.0
      %1579 = vmatpush.msra.mxu0 0.0
      %1580 = vmatpush.msra.mxu0 0.0
      %1581 = vmatpush.msra.mxu0 0.0
      %1582 = vmatpush.msra.mxu0 0.0
      %1583 = vmatpush.msra.mxu0 0.0
      %v1584 = vand.u32 %v974, 4294901760
      %v1585 = vsub.f32 %v974, %v1584
      %v1586 = vand.u32 %v1585, 4294901760
      %1587 = vmatpush.msra.mxu0 %v1586
      %v1588 = vand.u32 %v970, 4294901760
      %v1589 = vsub.f32 %v970, %v1588
      %v1590 = vand.u32 %v1589, 4294901760
      %1591 = vmatpush.msra.mxu0 %v1590
      %v1592 = vand.u32 %v982, 4294901760
      %1593 = vmatmul.f32.gmra.mxu0 %v1592
      %v1594 = vpop.f32.mrf.mxu0
      %v1595 = vadd.f32 %v1568, %v1594
      %1596 = vdwg.mxu0
      %1597 = vmatpush.msra.mxu0 0.0
      %1598 = vmatpush.msra.mxu0 0.0
      %1599 = vmatpush.msra.mxu0 0.0
      %1600 = vmatpush.msra.mxu0 0.0
      %1601 = vmatpush.msra.mxu0 0.0
      %1602 = vmatpush.msra.mxu0 0.0
      %1603 = vmatpush.msra.mxu0 0.0
      %1604 = vmatpush.msra.mxu0 0.0
      %1605 = vmatpush.msra.mxu0 0.0
      %1606 = vmatpush.msra.mxu0 0.0
      %1607 = vmatpush.msra.mxu0 0.0
      %1608 = vmatpush.msra.mxu0 0.0
      %1609 = vmatpush.msra.mxu0 0.0
      %1610 = vmatpush.msra.mxu0 0.0
      %v1611 = vand.u32 %v974, 4294901760
      %1612 = vmatpush.msra.mxu0 %v1611
      %v1613 = vand.u32 %v970, 4294901760
      %1614 = vmatpush.msra.mxu0 %v1613
      %v1615 = vand.u32 %v982, 4294901760
      %1616 = vmatmul.f32.gmra.mxu0 %v1615
      %v1617 = vpop.f32.mrf.mxu0
      %v1618 = vadd.f32 %v1595, %v1617
      %1619 = vdwg.mxu0
      %s1620 = scalar_lea.vmem %s164, 36
      %v1621 = vld [vmem:[%s1620] ss:$8 sm:$0xf]
      %vm1622 = vcmp.eq.f32.partialorder %v1621, 0.0
      %v1623 = vsel %vm1622, 1, 0
      %v1624 = vperm.slane %v1623, 0
      %v1625 = vperm.slane %v1623, 1
      %v1626 = vperm.slane %v1623, 2
      %v1627 = vperm.slane %v1623, 3
      %vm1628 = vcmp.eq.s32.totalorder %v1624, 1
      %vm1629 = vcmp.eq.s32.totalorder %v1625, 1
      %vm1630 = vcmp.eq.s32.totalorder %v1626, 1
      %vm1631 = vcmp.eq.s32.totalorder %v1627, 1
      %v1632 = vsel %vm1628, -inf, %v1141
      %v1633 = vsel %vm1629, -inf, %v1300
      %v1634 = vsel %vm1630, -inf, %v1459
      %v1635 = vsel %vm1631, -inf, %v1618
      %v1638 = vrot.slane %v1634, 4
      %v1639 = vrot.slane %v1635, 4
      %v1642 = vsel %vm194, %v1632, %v1638
      %v1643 = vsel %vm194, %v1633, %v1639
      %v1644 = vlaneseq
      %v1645 = vand.u32 %v1644, 127
      %v1646 = vadd.s32 %v1645, 128
      %v1647 = vcvt.s32.f32 %v1645
      %v1648 = vcvt.s32.f32 %v1646
      %v1649 = vmax.f32 %v1642, %v1643
      %1650 = vmax.xlane.f32.xlu0 %v1649
      %v1651 = vpop.xlane.xlu0 %1650
      %v1652 = vadd.f32 %v1651, 0.0
      %vm1653 = vcmp.eq.f32.partialorder %v1642, %v1651
      %vm1654 = vcmp.eq.f32.partialorder %v1643, %v1651
      %v1655 = vsel %vm1653, %v1647, 256.0
      %v1656 = vsel %vm1654, %v1648, 256.0
      %v1657 = vmin.f32 %v1655, %v1656
      %1658 = vmin.xlane.f32.xlu0 %v1657
      %v1659 = vpop.xlane.xlu0 %1658
      %vm1660 = vcmp.eq.f32.partialorder %v1647, %v1659
      %vm1661 = vcmp.eq.f32.partialorder %v1648, %v1659
      %v1662 = vsel %vm1660, -inf, %v1642
      %v1663 = vsel %vm1661, -inf, %v1643
      %v1664 = vmax.f32 %v1662, %v1663
      %1665 = vmax.xlane.f32.xlu0 %v1664
      %v1666 = vpop.xlane.xlu0 %1665
      %v1667 = vadd.f32 %v1652, %v1666
      %vm1668 = vcmp.eq.f32.partialorder %v1662, %v1666
      %vm1669 = vcmp.eq.f32.partialorder %v1663, %v1666
      %v1670 = vsel %vm1668, %v1647, 256.0
      %v1671 = vsel %vm1669, %v1648, 256.0
      %v1672 = vmin.f32 %v1670, %v1671
      %1673 = vmin.xlane.f32.xlu0 %v1672
      %v1674 = vpop.xlane.xlu0 %1673
      %vm1675 = vcmp.eq.f32.partialorder %v1647, %v1674
      %vm1676 = vcmp.eq.f32.partialorder %v1648, %v1674
      %v1677 = vsel %vm1675, -inf, %v1662
      %v1678 = vsel %vm1676, -inf, %v1663
      %v1679 = vmax.f32 %v1677, %v1678
      %1680 = vmax.xlane.f32.xlu0 %v1679
      %v1681 = vpop.xlane.xlu0 %1680
      %v1682 = vadd.f32 %v1667, %v1681
      %v1683 = vrcp.pop 3.0
      %v1684 = vmul.f32 3.0, %v1683
      %v1685 = vsub.f32 1.0, %v1684
      %v1686 = vmul.f32 %v1683, %v1685
      %v1687 = vadd.f32 %v1683, %v1686
      %vm1688 = vweird.f32 %v1683
      %v1689 = vsel %vm1688, %v1683, %v1687
      %v1690 = vmul.f32 %v1682, %v1689
      %vm1691 = vcmask 7168
      %1692 = vst.msk [vmem:[%s168] sm:$0xff] %vm1691, %v1690
      %p1693 = scmp.lt.s32.totalorder %s14, 1
      %s1694 = scalar_select %p1693, %s14, 1
      %s1695 = smul.addr %s1694, 8
      %s1696 = scalar_lea.vmem %s3, %s1695
      // Predicated region
      $region33: #{_lambda_.1} parent=31 // pred_check
        %p1697 = pneg %p100
      $region34: #{_lambda_.1} parent=31 // pred_check_branch
        %1699 = sbr.rel (%p1697) target = $region36
      $region35: #{_lambda_.1} parent=31 // pred_region
        _
      $region36: #{_lambda_.1} parent=31 // pred_fallthru
        _
    $region32: #{_lambda_.1} parent=5 // pred_fallthru
      _
    %p1700 = scmp.le.s32.totalorder 2, %s9
    // Predicated region
    $region37: #{_lambda_.1} parent=5 // pred_check
      %p1701 = pneg %p1700
    $region38: #{_lambda_.1} parent=5 // pred_check_branch
      %1703 = sbr.rel (%p1701) target = $region40
    $region39: #{_lambda_.1} parent=5 // pred_region
      %s1704 = ssub.s32 %s9, 2
      // Predicated region
      $region41: #{_lambda_.1} parent=39 // pred_check
        %p1705 = pneg %p106
      $region42: #{_lambda_.1} parent=39 // pred_check_branch
        %1707 = sbr.rel (%p1705) target = $region44
      $region43: #{_lambda_.1} parent=39 // pred_region
        %p1708 = scmp.lt.s32.totalorder %s15, 1
        %s1709 = scalar_select %p1708, %s15, 1
        %s1710 = smul.addr %s1709, 8
        %s1711 = scalar_lea.vmem %s3, %s1710
      $region44: #{_lambda_.1} parent=39 // pred_fallthru
        _
    $region40: #{_lambda_.1} parent=5 // pred_fallthru
      _
  $region6: #{_lambda_.1} parent=0 // loop_footer
    %s13 = sadd.s32 1, %s9
  $region7: #{_lambda_.1} parent=0 // loop_footer_branch
    %8 = sbr.rel target = $region3
  $region8: #{_lambda_.1} parent=0 // loop_exit
    _

</llo_original>
